<compile_context>
chip_gen: v7x
topology: tpu7x:2x2x1
jax: 0.10.0
libtpu: 0.0.40
codegen_flags: <defaults>
</compile_context>

<pallas_src>
import functools

import numpy as np
import jax
import jax.numpy as jnp
from jax.experimental import pallas as pl
from jax.experimental.pallas import tpu as pltpu


# ----------------------------- kernel body -----------------------------
def _gated_block_kernel(K, D, P, Cin, Cout, tile_t, fuse_layer2,
                        identity_residual, *refs):
    if identity_residual:
        (x_ref, w1_ref, b1_ref, w2_ref, b2_ref,
         o_ref, xbuf_ref, im1_ref, agbuf_ref, im2_ref) = refs
        wd_ref = bd_ref = None
    else:
        (x_ref, w1_ref, b1_ref, w2_ref, b2_ref, wd_ref, bd_ref,
         o_ref, xbuf_ref, im1_ref, agbuf_ref, im2_ref) = refs

    C2 = 2 * Cout
    KC = K * Cout
    t = pl.program_id(1)

    # ---- causal halo: zero padding at t == 0, previous tile's tail afterwards ----
    # (scratch persists across the sequential innermost time axis)
    if P > 0:
        @pl.when(t == 0)
        def _init_halos():
            xbuf_ref[:, :P] = jnp.zeros((Cin, P), xbuf_ref.dtype)
            agbuf_ref[:, :P] = jnp.zeros((C2, P), agbuf_ref.dtype)

        @pl.when(t > 0)
        def _carry_halos():
            xbuf_ref[:, :P] = xbuf_ref[:, tile_t:tile_t + P]
            agbuf_ref[:, :P] = agbuf_ref[:, tile_t:tile_t + P]

    x_ct = x_ref[0]                                      # (Cin, tile_t) f32
    x_bf = x_ct.astype(xbuf_ref.dtype)
    xbuf_ref[:, P:] = x_bf                               # bf16 copy behind the halo

    # ---- layer 1: conv1 & convgate1 fused, K taps folded into ONE MXU dot ----
    for j in range(K):                                   # im2col: lane-shifted taps
        im1_ref[j * Cin:(j + 1) * Cin, :] = xbuf_ref[:, j * D:j * D + tile_t]
    hg1 = jnp.dot(w1_ref[...], im1_ref[...],
                  preferred_element_type=jnp.float32) + b1_ref[...]
    h1 = hg1[:Cout, :]
    g1 = hg1[Cout:, :]
    a1 = h1 * jax.nn.sigmoid(g1)                         # gating in f32
    # chomp is implicit (only causal taps used); dropout == identity (eval mode).

    # stash [a1 ; g1] (bf16) behind the layer-2 causal halo
    agbuf_ref[:Cout, P:] = a1.astype(agbuf_ref.dtype)
    agbuf_ref[Cout:, P:] = g1.astype(agbuf_ref.dtype)

    # ---- layer 2: conv2(a1) & convgate2(g1), K taps folded into one dot each ----
    for j in range(K):
        im2_ref[j * Cout:(j + 1) * Cout, :] = (
            agbuf_ref[:Cout, j * D:j * D + tile_t])
        im2_ref[KC + j * Cout:KC + (j + 1) * Cout, :] = (
            agbuf_ref[Cout:, j * D:j * D + tile_t])
    if fuse_layer2:
        # block-diagonal fused weight: one dot while the MXU is under-filled
        hg2 = jnp.dot(w2_ref[...], im2_ref[...],
                      preferred_element_type=jnp.float32) + b2_ref[...]
        h2 = hg2[:Cout, :]
        g2 = hg2[Cout:, :]
    else:
        # large Cout: two separate dots, no zero-FLOP block-diagonal padding
        h2 = jnp.dot(w2_ref[0], im2_ref[:KC, :],
                     preferred_element_type=jnp.float32) + b2_ref[:Cout, :]
        g2 = jnp.dot(w2_ref[1], im2_ref[KC:, :],
                     preferred_element_type=jnp.float32) + b2_ref[Cout:, :]
    a2 = h2 * jax.nn.sigmoid(g2)

    # ---- residual: identity passthrough or 1x1 conv (downsample) ----
    if identity_residual:
        res = x_ct                                       # exact f32, no matmul
    else:
        res = jnp.dot(wd_ref[...], x_bf,
                      preferred_element_type=jnp.float32) + bd_ref[...]

    # ---- lane-dense (time-on-lanes) output: two unmasked half writes ----
    o_ref[0, :Cout, :] = a2 + res
    o_ref[0, Cout:, :] = g2 + res


# ------------------------- tiling / VMEM planning -------------------------
_HARD_TILE_T_CAP = 2048   # amortization of the ~0.35 us per-step cost saturates here


def _vmem_capacity_bytes():
    try:
        info = pltpu.get_tpu_info()
        for attr in ("vmem_capacity_bytes", "vmem_size_bytes"):
            v = getattr(info, attr, None)
            if v:
                return int(v)
    except Exception:
        pass
    return 64 * 1024 * 1024   # conservative default (v7x per-core VMEM)


def _tile_bytes(rows, cols, itemsize, sublane_pack):
    r = ((rows + sublane_pack - 1) // sublane_pack) * sublane_pack
    c = ((cols + 127) // 128) * 128
    return r * c * itemsize


def _estimate_vmem_bytes(tile_t, *, Cin, Cout, K, P, fuse_layer2,
                         identity_residual, weight_buffers):
    C2 = 2 * Cout
    KC = K * Cout
    b = 0
    # grid-pipelined input / output blocks (double-buffered by Pallas)
    b += 2 * _tile_bytes(Cin, tile_t, 4, 8)          # x tile   (f32, NCT)
    b += 2 * _tile_bytes(C2, tile_t, 4, 8)           # out tile (f32, NCT)
    # constant weights / biases
    wb = _tile_bytes(C2, K * Cin, 2, 16) + _tile_bytes(C2, 1, 4, 8)
    wb += (_tile_bytes(C2, 2 * KC, 2, 16) if fuse_layer2
           else 2 * _tile_bytes(Cout, KC, 2, 16))
    wb += _tile_bytes(C2, 1, 4, 8)
    if not identity_residual:
        wb += _tile_bytes(Cout, Cin, 2, 16) + _tile_bytes(Cout, 1, 4, 8)
    b += weight_buffers * wb
    # persistent VMEM scratch (halo buffers + im2col operands, bf16)
    b += _tile_bytes(Cin, tile_t + P, 2, 16)
    b += _tile_bytes(K * Cin, tile_t, 2, 16)
    b += _tile_bytes(C2, tile_t + P, 2, 16)
    b += _tile_bytes(2 * KC, tile_t, 2, 16)
    # live f32 intermediates (hg1/hg2, gating, residual) -- generous margin
    b += 6 * _tile_bytes(C2, tile_t, 4, 8)
    return b


def _plan_time_tiling(T, P, tile_t, est_fn, vmem_cap):
    budget = int(0.40 * vmem_cap)
    if tile_t is None:
        cap = 128
        while cap + 128 <= _HARD_TILE_T_CAP and est_fn(cap + 128) <= budget:
            cap += 128
        if T <= cap:
            return T, T                     # single tile, no padding needed
        tile_t = cap
    else:
        if tile_t >= T:
            return T, T
        assert tile_t % 128 == 0, (
            "explicit tile_t must be a multiple of 128 (time lives on the lane "
            "axis) unless it covers the whole sequence")
    assert tile_t >= P, "tile_t must cover the causal halo (K-1)*dilation"
    t_pad = -(-T // tile_t) * tile_t        # ragged T: pad, never blow up the tile
    return tile_t, t_pad


# ----------------------------- wrapper -----------------------------
def _build_weights(params, K, Cin, Cout, fuse_layer2, identity_residual):
    C2 = 2 * Cout
    KC = K * Cout
    # layer 1: shared input -> one (C2, K*Cin) transposed-flattened bf16 weight
    w1f = jnp.concatenate([params["w1"], params["wg1"]], axis=-1)       # (K,Cin,C2)
    w1t = jnp.transpose(w1f, (2, 0, 1)).reshape(C2, K * Cin).astype(jnp.bfloat16)
    b1c = jnp.concatenate([params["b1"], params["bg1"]],
                          axis=-1).reshape(C2, 1).astype(jnp.float32)
    # layer 2: either block-diagonal fused (small Cout) or two separate weights
    w2a = jnp.transpose(params["w2"], (2, 0, 1)).reshape(Cout, KC)
    w2g = jnp.transpose(params["wg2"], (2, 0, 1)).reshape(Cout, KC)
    if fuse_layer2:
        z = jnp.zeros((Cout, KC), w2a.dtype)
        w2t = jnp.concatenate([jnp.concatenate([w2a, z], axis=1),
                               jnp.concatenate([z, w2g], axis=1)], axis=0)
    else:
        w2t = jnp.stack([w2a, w2g], axis=0)
    w2t = w2t.astype(jnp.bfloat16)
    b2c = jnp.concatenate([params["b2"], params["bg2"]],
                          axis=-1).reshape(C2, 1).astype(jnp.float32)
    args = [w1t, b1c, w2t, b2c]
    if not identity_residual:
        args += [jnp.transpose(params["wd"]).astype(jnp.bfloat16),
                 params["bd"].reshape(Cout, 1).astype(jnp.float32)]
    return args


def _gated_temporal_block(x_nct, params, *, K, D, P, tile_t, fuse_layer2,
                          single_buffer_weights):
    B, Cin, T = x_nct.shape
    Cout = params["w1"].shape[-1]
    C2 = 2 * Cout
    KC = K * Cout
    assert P == (K - 1) * D, "causal TCN convention: padding == (K-1)*dilation"
    identity_residual = "wd" not in params     # n_inputs == n_outputs in the module
    if fuse_layer2 is None:
        # block-diag fusion only pays off while the MXU contraction is under-filled
        # (native dim: 128 on v5e, 256 on v6e/v7x -- 128 is the safe cutover).
        fuse_layer2 = Cout < 128
    weight_buffers = 1 if single_buffer_weights else 2

    vmem_cap = _vmem_capacity_bytes()
    est_fn = functools.partial(
        _estimate_vmem_bytes, Cin=Cin, Cout=Cout, K=K, P=P,
        fuse_layer2=fuse_layer2, identity_residual=identity_residual,
        weight_buffers=weight_buffers)
    tile_t, t_pad = _plan_time_tiling(T, P, tile_t, est_fn, vmem_cap)
    n_t = t_pad // tile_t
    vmem_limit_bytes = int(min(max(1.25 * est_fn(tile_t) + (8 << 20), 32 << 20),
                               0.85 * vmem_cap))

    weight_args = _build_weights(params, K, Cin, Cout, fuse_layer2,
                                 identity_residual)

    x_in = x_nct
    if t_pad != T:
        # trailing zero-pad is causally inert: out[..., :T] is unaffected.
        x_in = jnp.pad(x_nct, ((0, 0), (0, 0), (0, t_pad - T)))

    pipeline_mode = pl.Buffered(1) if single_buffer_weights else None

    def const_spec(shape):
        idx = lambda b, t: (0,) * len(shape)
        if pipeline_mode is None:
            return pl.BlockSpec(shape, idx)
        # constant-index weights: single-buffered (no double-buffer VMEM waste)
        return pl.BlockSpec(shape, idx, pipeline_mode=pipeline_mode)

    in_specs = [pl.BlockSpec((1, Cin, tile_t), lambda b, t: (b, 0, t)),
                const_spec(tuple(weight_args[0].shape)),
                const_spec(tuple(weight_args[1].shape)),
                const_spec(tuple(weight_args[2].shape)),
                const_spec(tuple(weight_args[3].shape))]
    if not identity_residual:
        in_specs += [const_spec(tuple(weight_args[4].shape)),
                     const_spec(tuple(weight_args[5].shape))]

    # advisory cost estimate so XLA schedules neighbouring HLO sensibly
    flops = 2 * B * t_pad * (K * Cin) * C2
    flops += (2 * B * t_pad * (2 * KC) * C2 if fuse_layer2
              else 2 * (2 * B * t_pad * KC * Cout))
    if not identity_residual:
        flops += 2 * B * t_pad * Cin * Cout
    w_bytes = sum(int(a.size) * a.dtype.itemsize for a in weight_args)
    cost = pl.CostEstimate(
        flops=int(flops),
        transcendentals=int(2 * B * t_pad * Cout),
        bytes_accessed=int(B * t_pad * Cin * 4 + B * t_pad * C2 * 4 + w_bytes))

    kernel = functools.partial(_gated_block_kernel, K, D, P, Cin, Cout, tile_t,
                               fuse_layer2, identity_residual)

    out = pl.pallas_call(
        kernel,
        out_shape=jax.ShapeDtypeStruct((B, C2, t_pad), jnp.float32),
        grid=(B, n_t),
        in_specs=in_specs,
        out_specs=pl.BlockSpec((1, C2, tile_t), lambda b, t: (b, 0, t)),
        scratch_shapes=[
            pltpu.VMEM((Cin, tile_t + P), jnp.bfloat16),   # x tile + causal halo
            pltpu.VMEM((K * Cin, tile_t), jnp.bfloat16),   # layer-1 im2col
            pltpu.VMEM((C2, tile_t + P), jnp.bfloat16),    # [a1 ; g1] + causal halo
            pltpu.VMEM((2 * KC, tile_t), jnp.bfloat16),    # layer-2 im2col
        ],
        compiler_params=pltpu.CompilerParams(
            # NOTE: halo carry requires the time axis to stay the LAST (innermost,
            # sequentially executed, "arbitrary") grid axis; only batch may be
            # "parallel" (megacore).  Do not reorder these without reworking it.
            dimension_semantics=("parallel", "arbitrary"),
            vmem_limit_bytes=vmem_limit_bytes),
        cost_estimate=cost,
    )(x_in, *weight_args)

    if t_pad != T:
        out = out[:, :, :T]
    return out


def gated_temporal_block(x_nct, params, *, K, D, P, tile_t=None,
                         fuse_layer2=None, single_buffer_weights=True):
    """x_nct: (B, Cin, T) float32  ->  (B, 2*Cout, T) float32 (PyTorch NCT)."""
    try:
        return _gated_temporal_block(x_nct, params, K=K, D=D, P=P, tile_t=tile_t,
                                     fuse_layer2=fuse_layer2,
                                     single_buffer_weights=single_buffer_weights)
    except Exception:
        if not single_buffer_weights:
            raise
        # graceful fallback if pl.Buffered(1) (single-buffered constant weights)
        # is not supported by this jax / Mosaic version.
        return _gated_temporal_block(x_nct, params, K=K, D=D, P=P, tile_t=tile_t,
                                     fuse_layer2=fuse_layer2,
                                     single_buffer_weights=False)


# ---------------- deterministic parameter construction ----------------
def make_wn_weight(key, shape_kic, scale=0.1):
    """weight_norm reparametrization folded: w = g * v / ||v|| (per out-channel)."""
    k1, k2 = jax.random.split(key)
    v = scale * jax.random.normal(k1, shape_kic, dtype=jnp.float32)
    g = 1.0 + 0.1 * jax.random.normal(k2, (shape_kic[-1],), dtype=jnp.float32)
    norm = jnp.sqrt(jnp.sum(v * v, axis=(0, 1), keepdims=True))
    return g[None, None, :] * v / norm


def make_params(key, Cin, Cout, K):
    ks = jax.random.split(key, 10)
    p = {
        "w1": make_wn_weight(ks[0], (K, Cin, Cout)),
        "b1": 0.05 * jax.random.normal(ks[1], (1, Cout), dtype=jnp.float32),
        "wg1": make_wn_weight(ks[2], (K, Cin, Cout)),
        "bg1": 0.05 * jax.random.normal(ks[3], (1, Cout), dtype=jnp.float32),
        "w2": make_wn_weight(ks[4], (K, Cout, Cout)),
        "b2": 0.05 * jax.random.normal(ks[5], (1, Cout), dtype=jnp.float32),
        "wg2": make_wn_weight(ks[6], (K, Cout, Cout)),
        "bg2": 0.05 * jax.random.normal(ks[7], (1, Cout), dtype=jnp.float32),
    }
    if Cin != Cout:      # downsample = nn.Conv1d(Cin, Cout, 1); else identity residual
        p["wd"] = 0.1 * jax.random.normal(ks[8], (Cin, Cout), dtype=jnp.float32)
        p["bd"] = 0.05 * jax.random.normal(ks[9], (1, Cout), dtype=jnp.float32)
    return p


# ---------------- pure-JAX reference (mirrors the PyTorch forward) ----------------
def ref_forward(x_nct, p, *, K, D, P):
    def tconv(x, w_kic, b, pad, dil):
        w_oik = jnp.transpose(w_kic, (2, 1, 0))          # (Cout, Cin, K) like torch
        y = jax.lax.conv_general_dilated(
            x, w_oik, window_strides=(1,), padding=[(pad, pad)],
            rhs_dilation=(dil,), dimension_numbers=("NCH", "OIH", "NCH"))
        return y + b[None, :, None]

    h = tconv(x_nct, p["w1"], p["b1"][0], P, D)
    g = tconv(x_nct, p["wg1"], p["bg1"][0], P, D)
    hid = h * jax.nn.sigmoid(g)
    hid = jnp.concatenate([hid, g], axis=1)[:, :, :-P]    # chomp1 (+dropout=identity)
    a1, g1 = jnp.split(hid, 2, axis=1)
    g2 = tconv(g1, p["wg2"], p["bg2"][0], P, D)
    h2 = tconv(a1, p["w2"], p["b2"][0], P, D)
    hid2 = h2 * jax.nn.sigmoid(g2)
    hid2 = jnp.concatenate([hid2, g2], axis=1)[:, :, :-P]  # chomp2 (+dropout=identity)
    if "wd" in p:
        res = jnp.einsum("io,bit->bot", p["wd"], x_nct) + p["bd"][0][None, :, None]
    else:
        res = x_nct
    return hid2 + jnp.concatenate([res, res], axis=1)


def _run_case(key, *, B, T, Cin, Cout, K, D, tile_t=None, rtol=2e-2, atol=3e-2):
    P = (K - 1) * D
    kx, kp = jax.random.split(key)
    x_nct = jax.random.normal(kx, (B, Cin, T), dtype=jnp.float32)   # PyTorch NCT
    params = make_params(kp, Cin, Cout, K)

    out = gated_temporal_block(x_nct, params, K=K, D=D, P=P, tile_t=tile_t)
    out = jax.block_until_ready(out)                                # (B, 2*Cout, T)

    ref = ref_forward(x_nct, params, K=K, D=D, P=P)
    np.testing.assert_allclose(np.asarray(out), np.asarray(ref),
                               rtol=rtol, atol=atol)


if __name__ == "__main__":
    key = jax.random.PRNGKey(0)
    k1, k2, k3 = jax.random.split(key, 3)

    # 1) n_inputs != n_outputs -> downsample (1x1 conv) residual, single time tile.
    _run_case(k1, B=2, T=16, Cin=4, Cout=8, K=3, D=2)

    # 2) identity residual, ragged T=200 with tile_t=128 -> wrapper pads to 256,
    #    two time tiles exercising the carried causal halo and the output crop.
    _run_case(k2, B=2, T=200, Cin=8, Cout=8, K=3, D=2, tile_t=128)

    # 3) Cout >= 128 -> un-fused layer 2 (two dots, no block-diagonal zero FLOPs).
    _run_case(k3, B=1, T=128, Cin=128, Cout=128, K=2, D=1, atol=5e-2)

    print("KERNEL_OK")
</pallas_src>

<mosaic_0001>
module attributes {stable_mosaic.version = 11 : i64} {
  func.func @_gated_block_kernel(%arg0: i32, %arg1: i32, %arg2: memref<1x4x16xf32, #tpu.memory_space<vmem>>, %arg3: memref<16x12xbf16, #tpu.memory_space<vmem>>, %arg4: memref<16x1xf32, #tpu.memory_space<vmem>>, %arg5: memref<16x48xbf16, #tpu.memory_space<vmem>>, %arg6: memref<16x1xf32, #tpu.memory_space<vmem>>, %arg7: memref<8x4xbf16, #tpu.memory_space<vmem>>, %arg8: memref<8x1xf32, #tpu.memory_space<vmem>>, %arg9: memref<1x16x16xf32, #tpu.memory_space<vmem>>, %arg10: memref<4x20xbf16, #tpu.memory_space<vmem>>, %arg11: memref<12x16xbf16, #tpu.memory_space<vmem>>, %arg12: memref<16x20xbf16, #tpu.memory_space<vmem>>, %arg13: memref<48x16xbf16, #tpu.memory_space<vmem>>) attributes {dimension_semantics = [#tpu.dimension_semantics<parallel>, #tpu.dimension_semantics<arbitrary>], iteration_bounds = array<i64: 2, 1>, scalar_prefetch = 0 : i64, scratch_operands = 4 : i64, tpu.core_type = #tpu.core_type<tc>, window_params = [{transform_indices = @transform_0, window_bounds = array<i64: 1, 4, 16>}, {pipeline_mode = #tpu.pipeline_mode<synchronous>, transform_indices = @transform_1, window_bounds = array<i64: 16, 12>}, {pipeline_mode = #tpu.pipeline_mode<synchronous>, transform_indices = @transform_2, window_bounds = array<i64: 16, 1>}, {pipeline_mode = #tpu.pipeline_mode<synchronous>, transform_indices = @transform_3, window_bounds = array<i64: 16, 48>}, {pipeline_mode = #tpu.pipeline_mode<synchronous>, transform_indices = @transform_4, window_bounds = array<i64: 16, 1>}, {pipeline_mode = #tpu.pipeline_mode<synchronous>, transform_indices = @transform_5, window_bounds = array<i64: 8, 4>}, {pipeline_mode = #tpu.pipeline_mode<synchronous>, transform_indices = @transform_6, window_bounds = array<i64: 8, 1>}, {transform_indices = @transform_7, window_bounds = array<i64: 1, 16, 16>}]} {
    %c0_i32 = arith.constant 0 : i32
    %0 = arith.cmpi eq, %arg1, %c0_i32 : i32
    %1 = arith.extui %0 : i1 to i32
    %c0_i32_0 = arith.constant 0 : i32
    %2 = arith.cmpi ne, %1, %c0_i32_0 : i32
    scf.if %2 {
      %cst_66 = arith.constant 0.000000e+00 : bf16
      %73 = vector.broadcast %cst_66 : bf16 to vector<4x4xbf16>
      %c0_67 = arith.constant 0 : index
      %c0_68 = arith.constant 0 : index
      %74 = vector.load %arg10[%c0_67, %c0_68] : memref<4x20xbf16, #tpu.memory_space<vmem>>, vector<4x4xbf16>
      tpu.vector_store %arg10[%c0_67, %c0_68], %73 {strides = array<i32>} : memref<4x20xbf16, #tpu.memory_space<vmem>>, vector<4x4xbf16>,
      %cst_69 = arith.constant 0.000000e+00 : bf16
      %75 = vector.broadcast %cst_69 : bf16 to vector<16x4xbf16>
      %c0_70 = arith.constant 0 : index
      %c0_71 = arith.constant 0 : index
      %76 = vector.load %arg12[%c0_70, %c0_71] : memref<16x20xbf16, #tpu.memory_space<vmem>>, vector<16x4xbf16>
      tpu.vector_store %arg12[%c0_70, %c0_71], %75 {strides = array<i32>} : memref<16x20xbf16, #tpu.memory_space<vmem>>, vector<16x4xbf16>,
    } else {
    }
    %c0_i32_1 = arith.constant 0 : i32
    %3 = arith.cmpi sgt, %arg1, %c0_i32_1 : i32
    %4 = arith.extui %3 : i1 to i32
    %c0_i32_2 = arith.constant 0 : i32
    %5 = arith.cmpi ne, %4, %c0_i32_2 : i32
    scf.if %5 {
      %c0_66 = arith.constant 0 : index
      %c16_67 = arith.constant 16 : index
      %73 = vector.load %arg10[%c0_66, %c16_67] : memref<4x20xbf16, #tpu.memory_space<vmem>>, vector<4x4xbf16>
      %c0_68 = arith.constant 0 : index
      %c0_69 = arith.constant 0 : index
      %74 = vector.load %arg10[%c0_68, %c0_69] : memref<4x20xbf16, #tpu.memory_space<vmem>>, vector<4x4xbf16>
      tpu.vector_store %arg10[%c0_68, %c0_69], %73 {strides = array<i32>} : memref<4x20xbf16, #tpu.memory_space<vmem>>, vector<4x4xbf16>,
      %c0_70 = arith.constant 0 : index
      %c16_71 = arith.constant 16 : index
      %75 = vector.load %arg12[%c0_70, %c16_71] : memref<16x20xbf16, #tpu.memory_space<vmem>>, vector<16x4xbf16>
      %c0_72 = arith.constant 0 : index
      %c0_73 = arith.constant 0 : index
      %76 = vector.load %arg12[%c0_72, %c0_73] : memref<16x20xbf16, #tpu.memory_space<vmem>>, vector<16x4xbf16>
      tpu.vector_store %arg12[%c0_72, %c0_73], %75 {strides = array<i32>} : memref<16x20xbf16, #tpu.memory_space<vmem>>, vector<16x4xbf16>,
    } else {
    }
    %c0 = arith.constant 0 : index
    %c0_3 = arith.constant 0 : index
    %c0_4 = arith.constant 0 : index
    %6 = vector.load %arg2[%c0, %c0_3, %c0_4] : memref<1x4x16xf32, #tpu.memory_space<vmem>>, vector<1x4x16xf32>
    %7 = vector.shape_cast %6 : vector<1x4x16xf32> to vector<4x16xf32>
    %8 = arith.truncf %7 : vector<4x16xf32> to vector<4x16xbf16>
    %c0_5 = arith.constant 0 : index
    %c4 = arith.constant 4 : index
    %9 = vector.load %arg10[%c0_5, %c4] : memref<4x20xbf16, #tpu.memory_space<vmem>>, vector<4x16xbf16>
    tpu.vector_store %arg10[%c0_5, %c4], %8 {strides = array<i32>} : memref<4x20xbf16, #tpu.memory_space<vmem>>, vector<4x16xbf16>,
    %c0_6 = arith.constant 0 : index
    %c0_7 = arith.constant 0 : index
    %10 = vector.load %arg10[%c0_6, %c0_7] : memref<4x20xbf16, #tpu.memory_space<vmem>>, vector<4x16xbf16>
    %c0_8 = arith.constant 0 : index
    %c0_9 = arith.constant 0 : index
    %11 = vector.load %arg11[%c0_8, %c0_9] : memref<12x16xbf16, #tpu.memory_space<vmem>>, vector<4x16xbf16>
    tpu.vector_store %arg11[%c0_8, %c0_9], %10 {strides = array<i32>} : memref<12x16xbf16, #tpu.memory_space<vmem>>, vector<4x16xbf16>,
    %c0_10 = arith.constant 0 : index
    %c2 = arith.constant 2 : index
    %12 = vector.load %arg10[%c0_10, %c2] : memref<4x20xbf16, #tpu.memory_space<vmem>>, vector<4x16xbf16>
    %c4_11 = arith.constant 4 : index
    %c0_12 = arith.constant 0 : index
    %13 = vector.load %arg11[%c4_11, %c0_12] : memref<12x16xbf16, #tpu.memory_space<vmem>>, vector<4x16xbf16>
    tpu.vector_store %arg11[%c4_11, %c0_12], %12 {strides = array<i32>} : memref<12x16xbf16, #tpu.memory_space<vmem>>, vector<4x16xbf16>,
    %c0_13 = arith.constant 0 : index
    %c4_14 = arith.constant 4 : index
    %14 = vector.load %arg10[%c0_13, %c4_14] : memref<4x20xbf16, #tpu.memory_space<vmem>>, vector<4x16xbf16>
    %c8 = arith.constant 8 : index
    %c0_15 = arith.constant 0 : index
    %15 = vector.load %arg11[%c8, %c0_15] : memref<12x16xbf16, #tpu.memory_space<vmem>>, vector<4x16xbf16>
    tpu.vector_store %arg11[%c8, %c0_15], %14 {strides = array<i32>} : memref<12x16xbf16, #tpu.memory_space<vmem>>, vector<4x16xbf16>,
    %c0_16 = arith.constant 0 : index
    %c0_17 = arith.constant 0 : index
    %16 = vector.load %arg3[%c0_16, %c0_17] : memref<16x12xbf16, #tpu.memory_space<vmem>>, vector<16x12xbf16>
    %c0_18 = arith.constant 0 : index
    %c0_19 = arith.constant 0 : index
    %17 = vector.load %arg11[%c0_18, %c0_19] : memref<12x16xbf16, #tpu.memory_space<vmem>>, vector<12x16xbf16>
    %cst = arith.constant dense<0.000000e+00> : vector<16x16xf32>
    %18 = tpu.matmul %16, %17, %cst {dimension_numbers = #tpu.dot_dimension_numbers<[1], [0], [0], [1], [0, 0, 1, 1], [], []>} : vector<16x12xbf16>, vector<12x16xbf16>, vector<16x16xf32> -> vector<16x16xf32>
    %c0_20 = arith.constant 0 : index
    %c0_21 = arith.constant 0 : index
    %19 = vector.load %arg4[%c0_20, %c0_21] : memref<16x1xf32, #tpu.memory_space<vmem>>, vector<16x1xf32>
    %20 = vector.broadcast %19 : vector<16x1xf32> to vector<16x16xf32>
    %21 = arith.addf %18, %20 : vector<16x16xf32>
    %22 = vector.extract_strided_slice %21 {offsets = [0, 0], sizes = [8, 16], strides = [1, 1]} : vector<16x16xf32> to vector<8x16xf32>
    %23 = vector.extract_strided_slice %21 {offsets = [8, 0], sizes = [8, 16], strides = [1, 1]} : vector<16x16xf32> to vector<8x16xf32>
    %24 = arith.negf %23 : vector<8x16xf32>
    %25 = math.exp %24 : vector<8x16xf32>
    %cst_22 = arith.constant 1.000000e+00 : f32
    %26 = vector.broadcast %cst_22 : f32 to vector<8x16xf32>
    %27 = arith.addf %26, %25 : vector<8x16xf32>
    %28 = arith.divf %26, %27 : vector<8x16xf32>
    %29 = arith.mulf %22, %28 : vector<8x16xf32>
    %30 = arith.truncf %29 : vector<8x16xf32> to vector<8x16xbf16>
    %c0_23 = arith.constant 0 : index
    %c4_24 = arith.constant 4 : index
    %31 = vector.load %arg12[%c0_23, %c4_24] : memref<16x20xbf16, #tpu.memory_space<vmem>>, vector<8x16xbf16>
    tpu.vector_store %arg12[%c0_23, %c4_24], %30 {strides = array<i32>} : memref<16x20xbf16, #tpu.memory_space<vmem>>, vector<8x16xbf16>,
    %32 = arith.truncf %23 : vector<8x16xf32> to vector<8x16xbf16>
    %c8_25 = arith.constant 8 : index
    %c4_26 = arith.constant 4 : index
    %33 = vector.load %arg12[%c8_25, %c4_26] : memref<16x20xbf16, #tpu.memory_space<vmem>>, vector<8x16xbf16>
    tpu.vector_store %arg12[%c8_25, %c4_26], %32 {strides = array<i32>} : memref<16x20xbf16, #tpu.memory_space<vmem>>, vector<8x16xbf16>,
    %c0_27 = arith.constant 0 : index
    %c0_28 = arith.constant 0 : index
    %34 = vector.load %arg12[%c0_27, %c0_28] : memref<16x20xbf16, #tpu.memory_space<vmem>>, vector<8x16xbf16>
    %c0_29 = arith.constant 0 : index
    %c0_30 = arith.constant 0 : index
    %35 = vector.load %arg13[%c0_29, %c0_30] : memref<48x16xbf16, #tpu.memory_space<vmem>>, vector<8x16xbf16>
    tpu.vector_store %arg13[%c0_29, %c0_30], %34 {strides = array<i32>} : memref<48x16xbf16, #tpu.memory_space<vmem>>, vector<8x16xbf16>,
    %c8_31 = arith.constant 8 : index
    %c0_32 = arith.constant 0 : index
    %36 = vector.load %arg12[%c8_31, %c0_32] : memref<16x20xbf16, #tpu.memory_space<vmem>>, vector<8x16xbf16>
    %c24 = arith.constant 24 : index
    %c0_33 = arith.constant 0 : index
    %37 = vector.load %arg13[%c24, %c0_33] : memref<48x16xbf16, #tpu.memory_space<vmem>>, vector<8x16xbf16>
    tpu.vector_store %arg13[%c24, %c0_33], %36 {strides = array<i32>} : memref<48x16xbf16, #tpu.memory_space<vmem>>, vector<8x16xbf16>,
    %c0_34 = arith.constant 0 : index
    %c2_35 = arith.constant 2 : index
    %38 = vector.load %arg12[%c0_34, %c2_35] : memref<16x20xbf16, #tpu.memory_space<vmem>>, vector<8x16xbf16>
    %c8_36 = arith.constant 8 : index
    %c0_37 = arith.constant 0 : index
    %39 = vector.load %arg13[%c8_36, %c0_37] : memref<48x16xbf16, #tpu.memory_space<vmem>>, vector<8x16xbf16>
    tpu.vector_store %arg13[%c8_36, %c0_37], %38 {strides = array<i32>} : memref<48x16xbf16, #tpu.memory_space<vmem>>, vector<8x16xbf16>,
    %c8_38 = arith.constant 8 : index
    %c2_39 = arith.constant 2 : index
    %40 = vector.load %arg12[%c8_38, %c2_39] : memref<16x20xbf16, #tpu.memory_space<vmem>>, vector<8x16xbf16>
    %c32 = arith.constant 32 : index
    %c0_40 = arith.constant 0 : index
    %41 = vector.load %arg13[%c32, %c0_40] : memref<48x16xbf16, #tpu.memory_space<vmem>>, vector<8x16xbf16>
    tpu.vector_store %arg13[%c32, %c0_40], %40 {strides = array<i32>} : memref<48x16xbf16, #tpu.memory_space<vmem>>, vector<8x16xbf16>,
    %c0_41 = arith.constant 0 : index
    %c4_42 = arith.constant 4 : index
    %42 = vector.load %arg12[%c0_41, %c4_42] : memref<16x20xbf16, #tpu.memory_space<vmem>>, vector<8x16xbf16>
    %c16 = arith.constant 16 : index
    %c0_43 = arith.constant 0 : index
    %43 = vector.load %arg13[%c16, %c0_43] : memref<48x16xbf16, #tpu.memory_space<vmem>>, vector<8x16xbf16>
    tpu.vector_store %arg13[%c16, %c0_43], %42 {strides = array<i32>} : memref<48x16xbf16, #tpu.memory_space<vmem>>, vector<8x16xbf16>,
    %c8_44 = arith.constant 8 : index
    %c4_45 = arith.constant 4 : index
    %44 = vector.load %arg12[%c8_44, %c4_45] : memref<16x20xbf16, #tpu.memory_space<vmem>>, vector<8x16xbf16>
    %c40 = arith.constant 40 : index
    %c0_46 = arith.constant 0 : index
    %45 = vector.load %arg13[%c40, %c0_46] : memref<48x16xbf16, #tpu.memory_space<vmem>>, vector<8x16xbf16>
    tpu.vector_store %arg13[%c40, %c0_46], %44 {strides = array<i32>} : memref<48x16xbf16, #tpu.memory_space<vmem>>, vector<8x16xbf16>,
    %c0_47 = arith.constant 0 : index
    %c0_48 = arith.constant 0 : index
    %46 = vector.load %arg5[%c0_47, %c0_48] : memref<16x48xbf16, #tpu.memory_space<vmem>>, vector<16x48xbf16>
    %c0_49 = arith.constant 0 : index
    %c0_50 = arith.constant 0 : index
    %47 = vector.load %arg13[%c0_49, %c0_50] : memref<48x16xbf16, #tpu.memory_space<vmem>>, vector<48x16xbf16>
    %cst_51 = arith.constant dense<0.000000e+00> : vector<16x16xf32>
    %48 = tpu.matmul %46, %47, %cst_51 {dimension_numbers = #tpu.dot_dimension_numbers<[1], [0], [0], [1], [0, 0, 1, 1], [], []>} : vector<16x48xbf16>, vector<48x16xbf16>, vector<16x16xf32> -> vector<16x16xf32>
    %c0_52 = arith.constant 0 : index
    %c0_53 = arith.constant 0 : index
    %49 = vector.load %arg6[%c0_52, %c0_53] : memref<16x1xf32, #tpu.memory_space<vmem>>, vector<16x1xf32>
    %50 = vector.broadcast %49 : vector<16x1xf32> to vector<16x16xf32>
    %51 = arith.addf %48, %50 : vector<16x16xf32>
    %52 = vector.extract_strided_slice %51 {offsets = [0, 0], sizes = [8, 16], strides = [1, 1]} : vector<16x16xf32> to vector<8x16xf32>
    %53 = vector.extract_strided_slice %51 {offsets = [8, 0], sizes = [8, 16], strides = [1, 1]} : vector<16x16xf32> to vector<8x16xf32>
    %54 = arith.negf %53 : vector<8x16xf32>
    %55 = math.exp %54 : vector<8x16xf32>
    %cst_54 = arith.constant 1.000000e+00 : f32
    %56 = vector.broadcast %cst_54 : f32 to vector<8x16xf32>
    %57 = arith.addf %56, %55 : vector<8x16xf32>
    %58 = arith.divf %56, %57 : vector<8x16xf32>
    %59 = arith.mulf %52, %58 : vector<8x16xf32>
    %c0_55 = arith.constant 0 : index
    %c0_56 = arith.constant 0 : index
    %60 = vector.load %arg7[%c0_55, %c0_56] : memref<8x4xbf16, #tpu.memory_space<vmem>>, vector<8x4xbf16>
    %cst_57 = arith.constant dense<0.000000e+00> : vector<8x16xf32>
    %61 = tpu.matmul %60, %8, %cst_57 {dimension_numbers = #tpu.dot_dimension_numbers<[1], [0], [0], [1], [0, 0, 1, 1], [], []>} : vector<8x4xbf16>, vector<4x16xbf16>, vector<8x16xf32> -> vector<8x16xf32>
    %c0_58 = arith.constant 0 : index
    %c0_59 = arith.constant 0 : index
    %62 = vector.load %arg8[%c0_58, %c0_59] : memref<8x1xf32, #tpu.memory_space<vmem>>, vector<8x1xf32>
    %63 = vector.broadcast %62 : vector<8x1xf32> to vector<8x16xf32>
    %64 = arith.addf %61, %63 : vector<8x16xf32>
    %65 = arith.addf %59, %64 : vector<8x16xf32>
    %c0_60 = arith.constant 0 : index
    %c0_61 = arith.constant 0 : index
    %c0_62 = arith.constant 0 : index
    %66 = vector.load %arg9[%c0_60, %c0_61, %c0_62] : memref<1x16x16xf32, #tpu.memory_space<vmem>>, vector<1x8x16xf32>
    %67 = vector.shape_cast %66 : vector<1x8x16xf32> to vector<8x16xf32>
    %68 = vector.shape_cast %65 : vector<8x16xf32> to vector<1x8x16xf32>
    tpu.vector_store %arg9[%c0_60, %c0_61, %c0_62], %68 {strides = array<i32>} : memref<1x16x16xf32, #tpu.memory_space<vmem>>, vector<1x8x16xf32>,
    %69 = arith.addf %53, %64 : vector<8x16xf32>
    %c0_63 = arith.constant 0 : index
    %c8_64 = arith.constant 8 : index
    %c0_65 = arith.constant 0 : index
    %70 = vector.load %arg9[%c0_63, %c8_64, %c0_65] : memref<1x16x16xf32, #tpu.memory_space<vmem>>, vector<1x8x16xf32>
    %71 = vector.shape_cast %70 : vector<1x8x16xf32> to vector<8x16xf32>
    %72 = vector.shape_cast %69 : vector<8x16xf32> to vector<1x8x16xf32>
    tpu.vector_store %arg9[%c0_63, %c8_64, %c0_65], %72 {strides = array<i32>} : memref<1x16x16xf32, #tpu.memory_space<vmem>>, vector<1x8x16xf32>,
    return
  }
  func.func @transform_0(%arg0: i32, %arg1: i32) -> (i32, i32, i32) {
    %c0_i32 = arith.constant 0 : i32
    %c0_i32_0 = arith.constant 0 : i32
    return %arg0, %c0_i32, %arg1 : i32, i32, i32
  }
  func.func @transform_1(%arg0: i32, %arg1: i32) -> (i32, i32) {
    %c0_i32 = arith.constant 0 : i32
    %c0_i32_0 = arith.constant 0 : i32
    %c0_i32_1 = arith.constant 0 : i32
    return %c0_i32, %c0_i32_0 : i32, i32
  }
  func.func @transform_2(%arg0: i32, %arg1: i32) -> (i32, i32) {
    %c0_i32 = arith.constant 0 : i32
    %c0_i32_0 = arith.constant 0 : i32
    %c0_i32_1 = arith.constant 0 : i32
    return %c0_i32, %c0_i32_0 : i32, i32
  }
  func.func @transform_3(%arg0: i32, %arg1: i32) -> (i32, i32) {
    %c0_i32 = arith.constant 0 : i32
    %c0_i32_0 = arith.constant 0 : i32
    %c0_i32_1 = arith.constant 0 : i32
    return %c0_i32, %c0_i32_0 : i32, i32
  }
  func.func @transform_4(%arg0: i32, %arg1: i32) -> (i32, i32) {
    %c0_i32 = arith.constant 0 : i32
    %c0_i32_0 = arith.constant 0 : i32
    %c0_i32_1 = arith.constant 0 : i32
    return %c0_i32, %c0_i32_0 : i32, i32
  }
  func.func @transform_5(%arg0: i32, %arg1: i32) -> (i32, i32) {
    %c0_i32 = arith.constant 0 : i32
    %c0_i32_0 = arith.constant 0 : i32
    %c0_i32_1 = arith.constant 0 : i32
    return %c0_i32, %c0_i32_0 : i32, i32
  }
  func.func @transform_6(%arg0: i32, %arg1: i32) -> (i32, i32) {
    %c0_i32 = arith.constant 0 : i32
    %c0_i32_0 = arith.constant 0 : i32
    %c0_i32_1 = arith.constant 0 : i32
    return %c0_i32, %c0_i32_0 : i32, i32
  }
  func.func @transform_7(%arg0: i32, %arg1: i32) -> (i32, i32, i32) {
    %c0_i32 = arith.constant 0 : i32
    %c0_i32_0 = arith.constant 0 : i32
    return %arg0, %c0_i32, %arg1 : i32, i32, i32
  }
}

module attributes {stable_mosaic.version = 11 : i64} {
  func.func @_gated_block_kernel(%arg0: i32, %arg1: i32, %arg2: memref<1x4x16xf32, #tpu.memory_space<vmem>>, %arg3: memref<16x12xbf16, #tpu.memory_space<vmem>>, %arg4: memref<16x1xf32, #tpu.memory_space<vmem>>, %arg5: memref<16x48xbf16, #tpu.memory_space<vmem>>, %arg6: memref<16x1xf32, #tpu.memory_space<vmem>>, %arg7: memref<8x4xbf16, #tpu.memory_space<vmem>>, %arg8: memref<8x1xf32, #tpu.memory_space<vmem>>, %arg9: memref<1x16x16xf32, #tpu.memory_space<vmem>>, %arg10: memref<4x20xbf16, #tpu.memory_space<vmem>>, %arg11: memref<12x16xbf16, #tpu.memory_space<vmem>>, %arg12: memref<16x20xbf16, #tpu.memory_space<vmem>>, %arg13: memref<48x16xbf16, #tpu.memory_space<vmem>>) attributes {dimension_semantics = [#tpu.dimension_semantics<parallel>, #tpu.dimension_semantics<arbitrary>], iteration_bounds = array<i64: 2, 1>, scalar_prefetch = 0 : i64, scratch_operands = 4 : i64, tpu.core_type = #tpu.core_type<tc>, window_params = [{transform_indices = @transform_0, window_bounds = array<i64: 1, 4, 16>}, {pipeline_mode = #tpu.pipeline_mode<synchronous>, transform_indices = @transform_1, window_bounds = array<i64: 16, 12>}, {pipeline_mode = #tpu.pipeline_mode<synchronous>, transform_indices = @transform_2, window_bounds = array<i64: 16, 1>}, {pipeline_mode = #tpu.pipeline_mode<synchronous>, transform_indices = @transform_3, window_bounds = array<i64: 16, 48>}, {pipeline_mode = #tpu.pipeline_mode<synchronous>, transform_indices = @transform_4, window_bounds = array<i64: 16, 1>}, {pipeline_mode = #tpu.pipeline_mode<synchronous>, transform_indices = @transform_5, window_bounds = array<i64: 8, 4>}, {pipeline_mode = #tpu.pipeline_mode<synchronous>, transform_indices = @transform_6, window_bounds = array<i64: 8, 1>}, {transform_indices = @transform_7, window_bounds = array<i64: 1, 16, 16>}]} {
    %c0_i32 = arith.constant 0 : i32
    %0 = arith.cmpi eq, %arg1, %c0_i32 : i32
    %1 = arith.extui %0 : i1 to i32
    %c0_i32_0 = arith.constant 0 : i32
    %2 = arith.cmpi ne, %1, %c0_i32_0 : i32
    scf.if %2 {
      %cst_66 = arith.constant 0.000000e+00 : bf16
      %73 = vector.broadcast %cst_66 : bf16 to vector<4x4xbf16>
      %c0_67 = arith.constant 0 : index
      %c0_68 = arith.constant 0 : index
      %74 = vector.load %arg10[%c0_67, %c0_68] : memref<4x20xbf16, #tpu.memory_space<vmem>>, vector<4x4xbf16>
      tpu.vector_store %arg10[%c0_67, %c0_68], %73 {strides = array<i32>} : memref<4x20xbf16, #tpu.memory_space<vmem>>, vector<4x4xbf16>,
      %cst_69 = arith.constant 0.000000e+00 : bf16
      %75 = vector.broadcast %cst_69 : bf16 to vector<16x4xbf16>
      %c0_70 = arith.constant 0 : index
      %c0_71 = arith.constant 0 : index
      %76 = vector.load %arg12[%c0_70, %c0_71] : memref<16x20xbf16, #tpu.memory_space<vmem>>, vector<16x4xbf16>
      tpu.vector_store %arg12[%c0_70, %c0_71], %75 {strides = array<i32>} : memref<16x20xbf16, #tpu.memory_space<vmem>>, vector<16x4xbf16>,
    } else {
    }
    %c0_i32_1 = arith.constant 0 : i32
    %3 = arith.cmpi sgt, %arg1, %c0_i32_1 : i32
    %4 = arith.extui %3 : i1 to i32
    %c0_i32_2 = arith.constant 0 : i32
    %5 = arith.cmpi ne, %4, %c0_i32_2 : i32
    scf.if %5 {
      %c0_66 = arith.constant 0 : index
      %c16_67 = arith.constant 16 : index
      %73 = vector.load %arg10[%c0_66, %c16_67] : memref<4x20xbf16, #tpu.memory_space<vmem>>, vector<4x4xbf16>
      %c0_68 = arith.constant 0 : index
      %c0_69 = arith.constant 0 : index
      %74 = vector.load %arg10[%c0_68, %c0_69] : memref<4x20xbf16, #tpu.memory_space<vmem>>, vector<4x4xbf16>
      tpu.vector_store %arg10[%c0_68, %c0_69], %73 {strides = array<i32>} : memref<4x20xbf16, #tpu.memory_space<vmem>>, vector<4x4xbf16>,
      %c0_70 = arith.constant 0 : index
      %c16_71 = arith.constant 16 : index
      %75 = vector.load %arg12[%c0_70, %c16_71] : memref<16x20xbf16, #tpu.memory_space<vmem>>, vector<16x4xbf16>
      %c0_72 = arith.constant 0 : index
      %c0_73 = arith.constant 0 : index
      %76 = vector.load %arg12[%c0_72, %c0_73] : memref<16x20xbf16, #tpu.memory_space<vmem>>, vector<16x4xbf16>
      tpu.vector_store %arg12[%c0_72, %c0_73], %75 {strides = array<i32>} : memref<16x20xbf16, #tpu.memory_space<vmem>>, vector<16x4xbf16>,
    } else {
    }
    %c0 = arith.constant 0 : index
    %c0_3 = arith.constant 0 : index
    %c0_4 = arith.constant 0 : index
    %6 = vector.load %arg2[%c0, %c0_3, %c0_4] : memref<1x4x16xf32, #tpu.memory_space<vmem>>, vector<1x4x16xf32>
    %7 = vector.shape_cast %6 : vector<1x4x16xf32> to vector<4x16xf32>
    %8 = arith.truncf %7 : vector<4x16xf32> to vector<4x16xbf16>
    %c0_5 = arith.constant 0 : index
    %c4 = arith.constant 4 : index
    %9 = vector.load %arg10[%c0_5, %c4] : memref<4x20xbf16, #tpu.memory_space<vmem>>, vector<4x16xbf16>
    tpu.vector_store %arg10[%c0_5, %c4], %8 {strides = array<i32>} : memref<4x20xbf16, #tpu.memory_space<vmem>>, vector<4x16xbf16>,
    %c0_6 = arith.constant 0 : index
    %c0_7 = arith.constant 0 : index
    %10 = vector.load %arg10[%c0_6, %c0_7] : memref<4x20xbf16, #tpu.memory_space<vmem>>, vector<4x16xbf16>
    %c0_8 = arith.constant 0 : index
    %c0_9 = arith.constant 0 : index
    %11 = vector.load %arg11[%c0_8, %c0_9] : memref<12x16xbf16, #tpu.memory_space<vmem>>, vector<4x16xbf16>
    tpu.vector_store %arg11[%c0_8, %c0_9], %10 {strides = array<i32>} : memref<12x16xbf16, #tpu.memory_space<vmem>>, vector<4x16xbf16>,
    %c0_10 = arith.constant 0 : index
    %c2 = arith.constant 2 : index
    %12 = vector.load %arg10[%c0_10, %c2] : memref<4x20xbf16, #tpu.memory_space<vmem>>, vector<4x16xbf16>
    %c4_11 = arith.constant 4 : index
    %c0_12 = arith.constant 0 : index
    %13 = vector.load %arg11[%c4_11, %c0_12] : memref<12x16xbf16, #tpu.memory_space<vmem>>, vector<4x16xbf16>
    tpu.vector_store %arg11[%c4_11, %c0_12], %12 {strides = array<i32>} : memref<12x16xbf16, #tpu.memory_space<vmem>>, vector<4x16xbf16>,
    %c0_13 = arith.constant 0 : index
    %c4_14 = arith.constant 4 : index
    %14 = vector.load %arg10[%c0_13, %c4_14] : memref<4x20xbf16, #tpu.memory_space<vmem>>, vector<4x16xbf16>
    %c8 = arith.constant 8 : index
    %c0_15 = arith.constant 0 : index
    %15 = vector.load %arg11[%c8, %c0_15] : memref<12x16xbf16, #tpu.memory_space<vmem>>, vector<4x16xbf16>
    tpu.vector_store %arg11[%c8, %c0_15], %14 {strides = array<i32>} : memref<12x16xbf16, #tpu.memory_space<vmem>>, vector<4x16xbf16>,
    %c0_16 = arith.constant 0 : index
    %c0_17 = arith.constant 0 : index
    %16 = vector.load %arg3[%c0_16, %c0_17] : memref<16x12xbf16, #tpu.memory_space<vmem>>, vector<16x12xbf16>
    %c0_18 = arith.constant 0 : index
    %c0_19 = arith.constant 0 : index
    %17 = vector.load %arg11[%c0_18, %c0_19] : memref<12x16xbf16, #tpu.memory_space<vmem>>, vector<12x16xbf16>
    %cst = arith.constant dense<0.000000e+00> : vector<16x16xf32>
    %18 = tpu.matmul %16, %17, %cst {dimension_numbers = #tpu.dot_dimension_numbers<[1], [0], [0], [1], [0, 0, 1, 1], [], []>} : vector<16x12xbf16>, vector<12x16xbf16>, vector<16x16xf32> -> vector<16x16xf32>
    %c0_20 = arith.constant 0 : index
    %c0_21 = arith.constant 0 : index
    %19 = vector.load %arg4[%c0_20, %c0_21] : memref<16x1xf32, #tpu.memory_space<vmem>>, vector<16x1xf32>
    %20 = vector.broadcast %19 : vector<16x1xf32> to vector<16x16xf32>
    %21 = arith.addf %18, %20 : vector<16x16xf32>
    %22 = vector.extract_strided_slice %21 {offsets = [0, 0], sizes = [8, 16], strides = [1, 1]} : vector<16x16xf32> to vector<8x16xf32>
    %23 = vector.extract_strided_slice %21 {offsets = [8, 0], sizes = [8, 16], strides = [1, 1]} : vector<16x16xf32> to vector<8x16xf32>
    %24 = arith.negf %23 : vector<8x16xf32>
    %25 = math.exp %24 : vector<8x16xf32>
    %cst_22 = arith.constant 1.000000e+00 : f32
    %26 = vector.broadcast %cst_22 : f32 to vector<8x16xf32>
    %27 = arith.addf %26, %25 : vector<8x16xf32>
    %28 = arith.divf %26, %27 : vector<8x16xf32>
    %29 = arith.mulf %22, %28 : vector<8x16xf32>
    %30 = arith.truncf %29 : vector<8x16xf32> to vector<8x16xbf16>
    %c0_23 = arith.constant 0 : index
    %c4_24 = arith.constant 4 : index
    %31 = vector.load %arg12[%c0_23, %c4_24] : memref<16x20xbf16, #tpu.memory_space<vmem>>, vector<8x16xbf16>
    tpu.vector_store %arg12[%c0_23, %c4_24], %30 {strides = array<i32>} : memref<16x20xbf16, #tpu.memory_space<vmem>>, vector<8x16xbf16>,
    %32 = arith.truncf %23 : vector<8x16xf32> to vector<8x16xbf16>
    %c8_25 = arith.constant 8 : index
    %c4_26 = arith.constant 4 : index
    %33 = vector.load %arg12[%c8_25, %c4_26] : memref<16x20xbf16, #tpu.memory_space<vmem>>, vector<8x16xbf16>
    tpu.vector_store %arg12[%c8_25, %c4_26], %32 {strides = array<i32>} : memref<16x20xbf16, #tpu.memory_space<vmem>>, vector<8x16xbf16>,
    %c0_27 = arith.constant 0 : index
    %c0_28 = arith.constant 0 : index
    %34 = vector.load %arg12[%c0_27, %c0_28] : memref<16x20xbf16, #tpu.memory_space<vmem>>, vector<8x16xbf16>
    %c0_29 = arith.constant 0 : index
    %c0_30 = arith.constant 0 : index
    %35 = vector.load %arg13[%c0_29, %c0_30] : memref<48x16xbf16, #tpu.memory_space<vmem>>, vector<8x16xbf16>
    tpu.vector_store %arg13[%c0_29, %c0_30], %34 {strides = array<i32>} : memref<48x16xbf16, #tpu.memory_space<vmem>>, vector<8x16xbf16>,
    %c8_31 = arith.constant 8 : index
    %c0_32 = arith.constant 0 : index
    %36 = vector.load %arg12[%c8_31, %c0_32] : memref<16x20xbf16, #tpu.memory_space<vmem>>, vector<8x16xbf16>
    %c24 = arith.constant 24 : index
    %c0_33 = arith.constant 0 : index
    %37 = vector.load %arg13[%c24, %c0_33] : memref<48x16xbf16, #tpu.memory_space<vmem>>, vector<8x16xbf16>
    tpu.vector_store %arg13[%c24, %c0_33], %36 {strides = array<i32>} : memref<48x16xbf16, #tpu.memory_space<vmem>>, vector<8x16xbf16>,
    %c0_34 = arith.constant 0 : index
    %c2_35 = arith.constant 2 : index
    %38 = vector.load %arg12[%c0_34, %c2_35] : memref<16x20xbf16, #tpu.memory_space<vmem>>, vector<8x16xbf16>
    %c8_36 = arith.constant 8 : index
    %c0_37 = arith.constant 0 : index
    %39 = vector.load %arg13[%c8_36, %c0_37] : memref<48x16xbf16, #tpu.memory_space<vmem>>, vector<8x16xbf16>
    tpu.vector_store %arg13[%c8_36, %c0_37], %38 {strides = array<i32>} : memref<48x16xbf16, #tpu.memory_space<vmem>>, vector<8x16xbf16>,
    %c8_38 = arith.constant 8 : index
    %c2_39 = arith.constant 2 : index
    %40 = vector.load %arg12[%c8_38, %c2_39] : memref<16x20xbf16, #tpu.memory_space<vmem>>, vector<8x16xbf16>
    %c32 = arith.constant 32 : index
    %c0_40 = arith.constant 0 : index
    %41 = vector.load %arg13[%c32, %c0_40] : memref<48x16xbf16, #tpu.memory_space<vmem>>, vector<8x16xbf16>
    tpu.vector_store %arg13[%c32, %c0_40], %40 {strides = array<i32>} : memref<48x16xbf16, #tpu.memory_space<vmem>>, vector<8x16xbf16>,
    %c0_41 = arith.constant 0 : index
    %c4_42 = arith.constant 4 : index
    %42 = vector.load %arg12[%c0_41, %c4_42] : memref<16x20xbf16, #tpu.memory_space<vmem>>, vector<8x16xbf16>
    %c16 = arith.constant 16 : index
    %c0_43 = arith.constant 0 : index
    %43 = vector.load %arg13[%c16, %c0_43] : memref<48x16xbf16, #tpu.memory_space<vmem>>, vector<8x16xbf16>
    tpu.vector_store %arg13[%c16, %c0_43], %42 {strides = array<i32>} : memref<48x16xbf16, #tpu.memory_space<vmem>>, vector<8x16xbf16>,
    %c8_44 = arith.constant 8 : index
    %c4_45 = arith.constant 4 : index
    %44 = vector.load %arg12[%c8_44, %c4_45] : memref<16x20xbf16, #tpu.memory_space<vmem>>, vector<8x16xbf16>
    %c40 = arith.constant 40 : index
    %c0_46 = arith.constant 0 : index
    %45 = vector.load %arg13[%c40, %c0_46] : memref<48x16xbf16, #tpu.memory_space<vmem>>, vector<8x16xbf16>
    tpu.vector_store %arg13[%c40, %c0_46], %44 {strides = array<i32>} : memref<48x16xbf16, #tpu.memory_space<vmem>>, vector<8x16xbf16>,
    %c0_47 = arith.constant 0 : index
    %c0_48 = arith.constant 0 : index
    %46 = vector.load %arg5[%c0_47, %c0_48] : memref<16x48xbf16, #tpu.memory_space<vmem>>, vector<16x48xbf16>
    %c0_49 = arith.constant 0 : index
    %c0_50 = arith.constant 0 : index
    %47 = vector.load %arg13[%c0_49, %c0_50] : memref<48x16xbf16, #tpu.memory_space<vmem>>, vector<48x16xbf16>
    %cst_51 = arith.constant dense<0.000000e+00> : vector<16x16xf32>
    %48 = tpu.matmul %46, %47, %cst_51 {dimension_numbers = #tpu.dot_dimension_numbers<[1], [0], [0], [1], [0, 0, 1, 1], [], []>} : vector<16x48xbf16>, vector<48x16xbf16>, vector<16x16xf32> -> vector<16x16xf32>
    %c0_52 = arith.constant 0 : index
    %c0_53 = arith.constant 0 : index
    %49 = vector.load %arg6[%c0_52, %c0_53] : memref<16x1xf32, #tpu.memory_space<vmem>>, vector<16x1xf32>
    %50 = vector.broadcast %49 : vector<16x1xf32> to vector<16x16xf32>
    %51 = arith.addf %48, %50 : vector<16x16xf32>
    %52 = vector.extract_strided_slice %51 {offsets = [0, 0], sizes = [8, 16], strides = [1, 1]} : vector<16x16xf32> to vector<8x16xf32>
    %53 = vector.extract_strided_slice %51 {offsets = [8, 0], sizes = [8, 16], strides = [1, 1]} : vector<16x16xf32> to vector<8x16xf32>
    %54 = arith.negf %53 : vector<8x16xf32>
    %55 = math.exp %54 : vector<8x16xf32>
    %cst_54 = arith.constant 1.000000e+00 : f32
    %56 = vector.broadcast %cst_54 : f32 to vector<8x16xf32>
    %57 = arith.addf %56, %55 : vector<8x16xf32>
    %58 = arith.divf %56, %57 : vector<8x16xf32>
    %59 = arith.mulf %52, %58 : vector<8x16xf32>
    %c0_55 = arith.constant 0 : index
    %c0_56 = arith.constant 0 : index
    %60 = vector.load %arg7[%c0_55, %c0_56] : memref<8x4xbf16, #tpu.memory_space<vmem>>, vector<8x4xbf16>
    %cst_57 = arith.constant dense<0.000000e+00> : vector<8x16xf32>
    %61 = tpu.matmul %60, %8, %cst_57 {dimension_numbers = #tpu.dot_dimension_numbers<[1], [0], [0], [1], [0, 0, 1, 1], [], []>} : vector<8x4xbf16>, vector<4x16xbf16>, vector<8x16xf32> -> vector<8x16xf32>
    %c0_58 = arith.constant 0 : index
    %c0_59 = arith.constant 0 : index
    %62 = vector.load %arg8[%c0_58, %c0_59] : memref<8x1xf32, #tpu.memory_space<vmem>>, vector<8x1xf32>
    %63 = vector.broadcast %62 : vector<8x1xf32> to vector<8x16xf32>
    %64 = arith.addf %61, %63 : vector<8x16xf32>
    %65 = arith.addf %59, %64 : vector<8x16xf32>
    %c0_60 = arith.constant 0 : index
    %c0_61 = arith.constant 0 : index
    %c0_62 = arith.constant 0 : index
    %66 = vector.load %arg9[%c0_60, %c0_61, %c0_62] : memref<1x16x16xf32, #tpu.memory_space<vmem>>, vector<1x8x16xf32>
    %67 = vector.shape_cast %66 : vector<1x8x16xf32> to vector<8x16xf32>
    %68 = vector.shape_cast %65 : vector<8x16xf32> to vector<1x8x16xf32>
    tpu.vector_store %arg9[%c0_60, %c0_61, %c0_62], %68 {strides = array<i32>} : memref<1x16x16xf32, #tpu.memory_space<vmem>>, vector<1x8x16xf32>,
    %69 = arith.addf %53, %64 : vector<8x16xf32>
    %c0_63 = arith.constant 0 : index
    %c8_64 = arith.constant 8 : index
    %c0_65 = arith.constant 0 : index
    %70 = vector.load %arg9[%c0_63, %c8_64, %c0_65] : memref<1x16x16xf32, #tpu.memory_space<vmem>>, vector<1x8x16xf32>
    %71 = vector.shape_cast %70 : vector<1x8x16xf32> to vector<8x16xf32>
    %72 = vector.shape_cast %69 : vector<8x16xf32> to vector<1x8x16xf32>
    tpu.vector_store %arg9[%c0_63, %c8_64, %c0_65], %72 {strides = array<i32>} : memref<1x16x16xf32, #tpu.memory_space<vmem>>, vector<1x8x16xf32>,
    return
  }
  func.func @transform_0(%arg0: i32, %arg1: i32) -> (i32, i32, i32) {
    %c0_i32 = arith.constant 0 : i32
    %c0_i32_0 = arith.constant 0 : i32
    return %arg0, %c0_i32, %arg1 : i32, i32, i32
  }
  func.func @transform_1(%arg0: i32, %arg1: i32) -> (i32, i32) {
    %c0_i32 = arith.constant 0 : i32
    %c0_i32_0 = arith.constant 0 : i32
    %c0_i32_1 = arith.constant 0 : i32
    return %c0_i32, %c0_i32_0 : i32, i32
  }
  func.func @transform_2(%arg0: i32, %arg1: i32) -> (i32, i32) {
    %c0_i32 = arith.constant 0 : i32
    %c0_i32_0 = arith.constant 0 : i32
    %c0_i32_1 = arith.constant 0 : i32
    return %c0_i32, %c0_i32_0 : i32, i32
  }
  func.func @transform_3(%arg0: i32, %arg1: i32) -> (i32, i32) {
    %c0_i32 = arith.constant 0 : i32
    %c0_i32_0 = arith.constant 0 : i32
    %c0_i32_1 = arith.constant 0 : i32
    return %c0_i32, %c0_i32_0 : i32, i32
  }
  func.func @transform_4(%arg0: i32, %arg1: i32) -> (i32, i32) {
    %c0_i32 = arith.constant 0 : i32
    %c0_i32_0 = arith.constant 0 : i32
    %c0_i32_1 = arith.constant 0 : i32
    return %c0_i32, %c0_i32_0 : i32, i32
  }
  func.func @transform_5(%arg0: i32, %arg1: i32) -> (i32, i32) {
    %c0_i32 = arith.constant 0 : i32
    %c0_i32_0 = arith.constant 0 : i32
    %c0_i32_1 = arith.constant 0 : i32
    return %c0_i32, %c0_i32_0 : i32, i32
  }
  func.func @transform_6(%arg0: i32, %arg1: i32) -> (i32, i32) {
    %c0_i32 = arith.constant 0 : i32
    %c0_i32_0 = arith.constant 0 : i32
    %c0_i32_1 = arith.constant 0 : i32
    return %c0_i32, %c0_i32_0 : i32, i32
  }
  func.func @transform_7(%arg0: i32, %arg1: i32) -> (i32, i32, i32) {
    %c0_i32 = arith.constant 0 : i32
    %c0_i32_0 = arith.constant 0 : i32
    return %arg0, %c0_i32, %arg1 : i32, i32, i32
  }
}

</mosaic_0001>

<llo_original>
// kernel: tpu_custom_call.1
$region0: #{tpu_custom_call.1}
  #allocation0 [shape = 'u32[]', space=smem, size = 0x4, offset = 0x4, fixed_abs, tag = 'smem constant byte address 0x4 - core index']
  #allocation1 [shape = 'u32[144,128]{1,0:T(1,128)}', space=vmem, size = 0x12000, scoped, tag = 'internal scratch']
  #allocation2 [shape = 'bf16[4,20]{1,0:T(4,128)(2,1)}', space=vmem, size = 0x400, scoped, tag = 'scratch operand']
  #allocation3 [shape = 'bf16[12,16]{1,0:T(8,128)(2,1)}', space=vmem, size = 0x1000, scoped, tag = 'scratch operand']
  #allocation4 [shape = 'bf16[16,20]{1,0:T(16,128)(2,1)}', space=vmem, size = 0x1000, scoped, tag = 'scratch operand']
  #allocation5 [shape = 'bf16[48,16]{1,0:T(16,128)(2,1)}', space=vmem, size = 0x3000, scoped, tag = 'scratch operand']
  %s0 = inlined_call_operand.vmem [shape: f32[2,4,16], index: 0, kind: input, shape index: {}]
  %s1 = inlined_call_operand.vmem [shape: bf16[16,12], index: 1, kind: input, shape index: {}]
  %s2 = inlined_call_operand.vmem [shape: f32[16,1], index: 2, kind: input, shape index: {}]
  %s3 = inlined_call_operand.vmem [shape: bf16[16,48], index: 3, kind: input, shape index: {}]
  %s4 = inlined_call_operand.vmem [shape: f32[16,1], index: 4, kind: input, shape index: {}]
  %s5 = inlined_call_operand.vmem [shape: bf16[8,4], index: 5, kind: input, shape index: {}]
  %s6 = inlined_call_operand.vmem [shape: f32[8,1], index: 6, kind: input, shape index: {}]
  %s7 = inlined_call_operand.hbm [shape: f32[2,16,16], index: 7, kind: output, shape index: {}]
  %s8 = sld [smem:[#allocation0]]
  $region69: #{tpu_custom_call.1} parent=0
    _
  %s10 = ssub.s32 1, %s8
  %s11 = scalar_select 0, %s10, %s8
  $region1: #{tpu_custom_call.1} parent=0
    #allocation6 [shape = 'u8[16384]{0}', space=vmem, size = 0x4000, scoped, tag = 'output window, operand 0']
    #allocation7 [shape = 's32[2]{0}', space=sflag, size = 0x8, scoped, tag = 'scoped memory for tpu_custom_call.1']
    %12 = vsyncpa [#allocation7], 0
    %s13 = scalar_lea.sflag [#allocation7], 1
    %14 = vsyncpa %s13, 0
    loop: start=0, step=1, limit=4
    $region2: #{tpu_custom_call.1} parent=1 // loop_pre_header
      _
    $region3: #{tpu_custom_call.1} parent=1 // loop_header
      %s16 = sphi 0, %s20
      %p17 = scmp.ge.s32.totalorder %s16, 4
      %s23 = sphi 0, %s35
      %s24 = sphi 0, %s31
      %s25 = sphi 0, %s23
      %s26 = sphi 0, %s24
      %s27 = sphi 0, %s25
      %s28 = sphi 0, %s26
      %s40 = sphi 0, %s42
      %s43 = sphi 0, %s40
      %s44 = sphi 0, %s43
      %s60 = sphi 0, %s44
      %s64 = sphi 0, %s64
      %s66 = sphi 0, %s64
      %s67 = sphi 0, %s66
      %s81 = sphi 0, %s67
      %s85 = sphi 0, %s85
      %s87 = sphi 0, %s85
      %s88 = sphi 0, %s87
      %s102 = sphi 0, %s88
      %s106 = sphi 0, %s106
      %s108 = sphi 0, %s106
      %s109 = sphi 0, %s108
      %s123 = sphi 0, %s109
      %s127 = sphi 0, %s127
      %s129 = sphi 0, %s127
      %s130 = sphi 0, %s129
      %s144 = sphi 0, %s130
      %s148 = sphi 0, %s148
      %s150 = sphi 0, %s148
      %s151 = sphi 0, %s150
      %s165 = sphi 0, %s151
      %s169 = sphi 0, %s169
      %s171 = sphi 0, %s169
      %s172 = sphi 0, %s171
      %s186 = sphi 0, %s172
      %s194 = sphi 0, %s196
      %s197 = sphi 0, %s194
      %s198 = sphi 0, %s197
      %s214 = sphi 0, %s198
    $region4: #{tpu_custom_call.1} parent=1 // loop_header_branch
      %19 = sbr.rel (%p17) target = $region8
    $region5: #{tpu_custom_call.1} parent=1 // loop_body
      %s21 = ssub.s32 %s16, 1
      %s22 = ssub.s32 %s16, 2
      %s29 = sadd.s32 1, %s24
      %p30 = scmp.ge.s32.totalorder %s29, 1
      %s31 = scalar_select %p30, 0, %s29
      %s32 = sadd.s32 1, %s23
      %s33 = scalar_select %p30, %s32, %s23
      %p34 = scmp.ge.s32.totalorder %s33, 2
      %s35 = scalar_select %p34, 0, %s33
      %s36 = ssub.s32 %s23, %s35
      %s37 = ssub.s32 %s24, %s31
      %s38 = sor.u32 %s36, %s37
      %p39 = scmp.eq.s32.totalorder %s38, 0
      %s41 = sadd.s32 %s40, 1
      %s42 = scalar_select %p39, %s40, %s41
      %p45 = pneg %p39
      %p46 = scmp.eq.s32.totalorder %s16, 1
      %p47 = por %p45, %p46
      %p48 = scmp.ne.s32.totalorder %s40, %s43
      %p49 = scmp.eq.s32.totalorder %s16, 0
      %p50 = por %p48, %p49
      %p51 = scmp.ne.s32.totalorder %s40, %s43
      %p52 = scmp.eq.s32.totalorder %s21, 1
      %p53 = por %p51, %p52
      %p54 = scmp.ne.s32.totalorder %s43, %s44
      %p55 = scmp.eq.s32.totalorder %s21, 0
      %p56 = por %p54, %p55
      %p57 = scmp.ne.s32.totalorder %s43, %s44
      %p58 = scmp.eq.s32.totalorder %s22, 1
      %p59 = por %p57, %p58
      %p61 = scmp.ne.s32.totalorder %s44, %s60
      %p62 = scmp.eq.s32.totalorder %s22, 0
      %p63 = por %p61, %p62
      %s65 = sadd.s32 %s64, 1
      %p68 = scmp.eq.s32.totalorder %s16, 1
      %p69 = scmp.ne.s32.totalorder %s64, %s66
      %p70 = scmp.eq.s32.totalorder %s16, 0
      %p71 = por %p69, %p70
      %p72 = scmp.ne.s32.totalorder %s64, %s66
      %p73 = scmp.eq.s32.totalorder %s21, 1
      %p74 = por %p72, %p73
      %p75 = scmp.ne.s32.totalorder %s66, %s67
      %p76 = scmp.eq.s32.totalorder %s21, 0
      %p77 = por %p75, %p76
      %p78 = scmp.ne.s32.totalorder %s66, %s67
      %p79 = scmp.eq.s32.totalorder %s22, 1
      %p80 = por %p78, %p79
      %p82 = scmp.ne.s32.totalorder %s67, %s81
      %p83 = scmp.eq.s32.totalorder %s22, 0
      %p84 = por %p82, %p83
      %s86 = sadd.s32 %s85, 1
      %p89 = scmp.eq.s32.totalorder %s16, 1
      %p90 = scmp.ne.s32.totalorder %s85, %s87
      %p91 = scmp.eq.s32.totalorder %s16, 0
      %p92 = por %p90, %p91
      %p93 = scmp.ne.s32.totalorder %s85, %s87
      %p94 = scmp.eq.s32.totalorder %s21, 1
      %p95 = por %p93, %p94
      %p96 = scmp.ne.s32.totalorder %s87, %s88
      %p97 = scmp.eq.s32.totalorder %s21, 0
      %p98 = por %p96, %p97
      %p99 = scmp.ne.s32.totalorder %s87, %s88
      %p100 = scmp.eq.s32.totalorder %s22, 1
      %p101 = por %p99, %p100
      %p103 = scmp.ne.s32.totalorder %s88, %s102
      %p104 = scmp.eq.s32.totalorder %s22, 0
      %p105 = por %p103, %p104
      %s107 = sadd.s32 %s106, 1
      %p110 = scmp.eq.s32.totalorder %s16, 1
      %p111 = scmp.ne.s32.totalorder %s106, %s108
      %p112 = scmp.eq.s32.totalorder %s16, 0
      %p113 = por %p111, %p112
      %p114 = scmp.ne.s32.totalorder %s106, %s108
      %p115 = scmp.eq.s32.totalorder %s21, 1
      %p116 = por %p114, %p115
      %p117 = scmp.ne.s32.totalorder %s108, %s109
      %p118 = scmp.eq.s32.totalorder %s21, 0
      %p119 = por %p117, %p118
      %p120 = scmp.ne.s32.totalorder %s108, %s109
      %p121 = scmp.eq.s32.totalorder %s22, 1
      %p122 = por %p120, %p121
      %p124 = scmp.ne.s32.totalorder %s109, %s123
      %p125 = scmp.eq.s32.totalorder %s22, 0
      %p126 = por %p124, %p125
      %s128 = sadd.s32 %s127, 1
      %p131 = scmp.eq.s32.totalorder %s16, 1
      %p132 = scmp.ne.s32.totalorder %s127, %s129
      %p133 = scmp.eq.s32.totalorder %s16, 0
      %p134 = por %p132, %p133
      %p135 = scmp.ne.s32.totalorder %s127, %s129
      %p136 = scmp.eq.s32.totalorder %s21, 1
      %p137 = por %p135, %p136
      %p138 = scmp.ne.s32.totalorder %s129, %s130
      %p139 = scmp.eq.s32.totalorder %s21, 0
      %p140 = por %p138, %p139
      %p141 = scmp.ne.s32.totalorder %s129, %s130
      %p142 = scmp.eq.s32.totalorder %s22, 1
      %p143 = por %p141, %p142
      %p145 = scmp.ne.s32.totalorder %s130, %s144
      %p146 = scmp.eq.s32.totalorder %s22, 0
      %p147 = por %p145, %p146
      %s149 = sadd.s32 %s148, 1
      %p152 = scmp.eq.s32.totalorder %s16, 1
      %p153 = scmp.ne.s32.totalorder %s148, %s150
      %p154 = scmp.eq.s32.totalorder %s16, 0
      %p155 = por %p153, %p154
      %p156 = scmp.ne.s32.totalorder %s148, %s150
      %p157 = scmp.eq.s32.totalorder %s21, 1
      %p158 = por %p156, %p157
      %p159 = scmp.ne.s32.totalorder %s150, %s151
      %p160 = scmp.eq.s32.totalorder %s21, 0
      %p161 = por %p159, %p160
      %p162 = scmp.ne.s32.totalorder %s150, %s151
      %p163 = scmp.eq.s32.totalorder %s22, 1
      %p164 = por %p162, %p163
      %p166 = scmp.ne.s32.totalorder %s151, %s165
      %p167 = scmp.eq.s32.totalorder %s22, 0
      %p168 = por %p166, %p167
      %s170 = sadd.s32 %s169, 1
      %p173 = scmp.eq.s32.totalorder %s16, 1
      %p174 = scmp.ne.s32.totalorder %s169, %s171
      %p175 = scmp.eq.s32.totalorder %s16, 0
      %p176 = por %p174, %p175
      %p177 = scmp.ne.s32.totalorder %s169, %s171
      %p178 = scmp.eq.s32.totalorder %s21, 1
      %p179 = por %p177, %p178
      %p180 = scmp.ne.s32.totalorder %s171, %s172
      %p181 = scmp.eq.s32.totalorder %s21, 0
      %p182 = por %p180, %p181
      %p183 = scmp.ne.s32.totalorder %s171, %s172
      %p184 = scmp.eq.s32.totalorder %s22, 1
      %p185 = por %p183, %p184
      %p187 = scmp.ne.s32.totalorder %s172, %s186
      %p188 = scmp.eq.s32.totalorder %s22, 0
      %p189 = por %p187, %p188
      %s190 = ssub.s32 %s23, %s35
      %s191 = ssub.s32 %s24, %s31
      %s192 = sor.u32 %s190, %s191
      %p193 = scmp.eq.s32.totalorder %s192, 0
      %s195 = sadd.s32 %s194, 1
      %s196 = scalar_select %p193, %s194, %s195
      %p199 = pneg %p193
      %p200 = scmp.eq.s32.totalorder %s16, 1
      %p201 = por %p199, %p200
      %p202 = scmp.ne.s32.totalorder %s194, %s197
      %p203 = scmp.eq.s32.totalorder %s16, 0
      %p204 = por %p202, %p203
      %p205 = scmp.ne.s32.totalorder %s194, %s197
      %p206 = scmp.eq.s32.totalorder %s21, 1
      %p207 = por %p205, %p206
      %p208 = scmp.ne.s32.totalorder %s197, %s198
      %p209 = scmp.eq.s32.totalorder %s21, 0
      %p210 = por %p208, %p209
      %p211 = scmp.ne.s32.totalorder %s197, %s198
      %p212 = scmp.eq.s32.totalorder %s22, 1
      %p213 = por %p211, %p212
      %p215 = scmp.ne.s32.totalorder %s198, %s214
      %p216 = scmp.eq.s32.totalorder %s22, 0
      %p217 = por %p215, %p216
      %p218 = scmp.le.s32.totalorder 1, %s16
      %p219 = scmp.lt.s32.totalorder %s16, 3
      %p220 = pnand %p218, %p219
      %p221 = pneg %p220
      // Predicated region
      $region9: #{tpu_custom_call.1} parent=5 // pred_check
        _
      $region10: #{tpu_custom_call.1} parent=5 // pred_check_branch
        %223 = sbr.rel (%p220) target = $region12
      $region11: #{tpu_custom_call.1} parent=5 // pred_region
        %s224 = ssub.s32 %s16, 1
        // Predicated region
        $region13: #{tpu_custom_call.1} parent=11 // pred_check
          %p225 = pneg %p77
        $region14: #{tpu_custom_call.1} parent=11 // pred_check_branch
          %227 = sbr.rel (%p225) target = $region16
        $region15: #{tpu_custom_call.1} parent=11 // pred_region
          _
        $region16: #{tpu_custom_call.1} parent=11 // pred_fallthru
          _
        // Predicated region
        $region17: #{tpu_custom_call.1} parent=11 // pred_check
          %p228 = pneg %p98
        $region18: #{tpu_custom_call.1} parent=11 // pred_check_branch
          %230 = sbr.rel (%p228) target = $region20
        $region19: #{tpu_custom_call.1} parent=11 // pred_region
          _
        $region20: #{tpu_custom_call.1} parent=11 // pred_fallthru
          _
        // Predicated region
        $region21: #{tpu_custom_call.1} parent=11 // pred_check
          %p231 = pneg %p119
        $region22: #{tpu_custom_call.1} parent=11 // pred_check_branch
          %233 = sbr.rel (%p231) target = $region24
        $region23: #{tpu_custom_call.1} parent=11 // pred_region
          _
        $region24: #{tpu_custom_call.1} parent=11 // pred_fallthru
          _
        // Predicated region
        $region25: #{tpu_custom_call.1} parent=11 // pred_check
          %p234 = pneg %p140
        $region26: #{tpu_custom_call.1} parent=11 // pred_check_branch
          %236 = sbr.rel (%p234) target = $region28
        $region27: #{tpu_custom_call.1} parent=11 // pred_region
          _
        $region28: #{tpu_custom_call.1} parent=11 // pred_fallthru
          _
        // Predicated region
        $region29: #{tpu_custom_call.1} parent=11 // pred_check
          %p237 = pneg %p161
        $region30: #{tpu_custom_call.1} parent=11 // pred_check_branch
          %239 = sbr.rel (%p237) target = $region32
        $region31: #{tpu_custom_call.1} parent=11 // pred_region
          _
        $region32: #{tpu_custom_call.1} parent=11 // pred_fallthru
          _
        // Predicated region
        $region33: #{tpu_custom_call.1} parent=11 // pred_check
          %p240 = pneg %p182
        $region34: #{tpu_custom_call.1} parent=11 // pred_check_branch
          %242 = sbr.rel (%p240) target = $region36
        $region35: #{tpu_custom_call.1} parent=11 // pred_region
          _
        $region36: #{tpu_custom_call.1} parent=11 // pred_fallthru
          _
      $region12: #{tpu_custom_call.1} parent=5 // pred_fallthru
        _
      %p243 = scmp.lt.s32.totalorder %s16, 2
      // Predicated region
      $region37: #{tpu_custom_call.1} parent=5 // pred_check
        %p244 = pneg %p243
      $region38: #{tpu_custom_call.1} parent=5 // pred_check_branch
        %246 = sbr.rel (%p244) target = $region40
      $region39: #{tpu_custom_call.1} parent=5 // pred_region
        // Predicated region
        $region41: #{tpu_custom_call.1} parent=39 // pred_check
          %p247 = pneg %p50
        $region42: #{tpu_custom_call.1} parent=39 // pred_check_branch
          %249 = sbr.rel (%p247) target = $region44
        $region43: #{tpu_custom_call.1} parent=39 // pred_region
          %p250 = scmp.lt.s32.totalorder %s23, 1
          %s251 = scalar_select %p250, %s23, 1
          %p252 = scmp.lt.s32.totalorder %s24, 0
          %s253 = scalar_select %p252, %s24, 0
          %s254 = sadd.s32 %s253, %s251
          %s255 = smul.addr %s254, 4
          %s256 = scalar_lea.vmem %s0, %s255
        $region44: #{tpu_custom_call.1} parent=39 // pred_fallthru
          _
      $region40: #{tpu_custom_call.1} parent=5 // pred_fallthru
        _
      %p257 = scmp.le.s32.totalorder 1, %s16
      %p258 = scmp.lt.s32.totalorder %s16, 3
      %p259 = pnand %p257, %p258
      %p260 = pneg %p259
      // Predicated region
      $region45: #{tpu_custom_call.1} parent=5 // pred_check
        _
      $region46: #{tpu_custom_call.1} parent=5 // pred_check_branch
        %262 = sbr.rel (%p259) target = $region48
      $region47: #{tpu_custom_call.1} parent=5 // pred_region
        %s263 = ssub.s32 %s16, 1
        %p264 = scmp.lt.s32.totalorder %s25, 1
        %s265 = scalar_select %p264, %s25, 1
        %p266 = scmp.lt.s32.totalorder %s26, 0
        %s267 = scalar_select %p266, %s26, 0
        %s268 = sadd.s32 %s267, %s265
        %s269 = smul.addr %s268, 4
        %s270 = scalar_lea.vmem %s0, %s269
        %p271 = pneg %p56
        %p272 = pneg %p53
        %p273 = pneg %p77
        %p274 = pneg %p74
        %p275 = pneg %p98
        %p276 = pneg %p95
        %p277 = pneg %p119
        %p278 = pneg %p116
        %p279 = pneg %p140
        %p280 = pneg %p137
        %p281 = pneg %p161
        %p282 = pneg %p158
        %p283 = pneg %p182
        %p284 = pneg %p179
        %p285 = pneg %p210
        %p286 = pneg %p207
        %s287 = sand.u32 %s197, 1
        %s288 = scalar_lea.sflag [#allocation7], %s287
        %s289 = sand.u32 %s197, 1
        %s290 = smul.addr %s289, 16
        %s291 = scalar_lea.vmem [#allocation6], %s290
        %p292 = scmp.lt.s32.totalorder %s25, 1
        %s293 = scalar_select %p292, %s25, 1
        %p294 = scmp.lt.s32.totalorder %s26, 0
        %s295 = scalar_select %p294, %s26, 0
        %s296 = sadd.s32 %s295, %s293
        %s297 = smul.addr %s296, 4
        %s298 = scalar_lea.vmem %s0, %s297
        %p300 = scmp.eq.s32.totalorder %s26, 0
        // Predicated region
        $region49: #{tpu_custom_call.1} parent=47 // pred_check
          %p301 = pneg %p300
        $region50: #{tpu_custom_call.1} parent=47 // pred_check_branch
          %303 = sbr.rel (%p301) target = $region52
        $region51: #{tpu_custom_call.1} parent=47 // pred_region
          %vm304 = vcmask 25600
          %305 = vst.msk [vmem:[#allocation2] sm:$0x3] %vm304, 0
          %vm306 = vcmask 31744
          %307 = vst.msk [vmem:[#allocation4] sm:$0xff] %vm306, 0
        $region52: #{tpu_custom_call.1} parent=47 // pred_fallthru
          _
        %p308 = scmp.gt.s32.totalorder %s26, 0
        // Predicated region
        $region53: #{tpu_custom_call.1} parent=47 // pred_check
          %p309 = pneg %p308
        $region54: #{tpu_custom_call.1} parent=47 // pred_check_branch
          %311 = sbr.rel (%p309) target = $region56
        $region55: #{tpu_custom_call.1} parent=47 // pred_region
          %v312 = vld [vmem:[#allocation2] sm:$0x3]
          %314 = vrot.lane.b32.xlu0 %v312, 112
          %v315 = vpop.permute.xlu0 %314
          %vm317 = vcmask 25600
          %318 = vst.msk [vmem:[#allocation2] sm:$0x3] %vm317, %v315
          %v319 = vld [vmem:[#allocation4] sm:$0xff]
          %321 = vrot.lane.b32.xlu0 %v319, 112
          %v322 = vpop.permute.xlu0 %321
          %vm324 = vcmask 31744
          %325 = vst.msk [vmem:[#allocation4] sm:$0xff] %vm324, %v322
        $region56: #{tpu_custom_call.1} parent=47 // pred_fallthru
          _
        %v326 = vld [vmem:[%s298] sm:$0xf]
        %v327 = vpack.c.bf16 %v326, %v326
        %v330 = vunpack.c.l.s4 1983009808
        %v331 = vunpack.c.0.s8 %v330
        %v332 = vlaneseq
        %v333 = vshrl.u32 %v332, 7
        %v334 = vsub.s32 %v331, %v333
        %v335 = vrot.slane %v327, %v334
        %336 = vrot.lane.b32.xlu0 %v335, 4
        %v337 = vpop.permute.xlu0 %336
        %vm339 = vcmask 156704
        %340 = vst.msk [vmem:[#allocation2] sm:$0x3] %vm339, %v337
        %v341 = vld [vmem:[#allocation2] sm:$0x3]
        %vm342 = vcmask 123904
        %343 = vst.msk [vmem:[#allocation3] sm:$0x3] %vm342, %v341
        %v344 = vld [vmem:[#allocation2] sm:$0x3]
        %v346 = vcombine.low %v344, %v344
        %v348 = vunpack.c.l.s4 1983009808
        %v349 = vunpack.c.0.s8 %v348
        %v350 = vlaneseq
        %v351 = vshrl.u32 %v350, 7
        %v352 = vsub.s32 %v349, %v351
        %v353 = vrot.slane %v346, %v352
        %354 = vrot.lane.b32.xlu0 %v353, 126
        %v355 = vpop.permute.xlu0 %354
        %vm357 = vcmask 125954
        %358 = vst.msk [vmem:[#allocation3] sm:$0xc] %vm357, %v355
        %v359 = vld [vmem:[#allocation2] sm:$0x3]
        %v362 = vunpack.c.l.s4 1983009808
        %v363 = vunpack.c.0.s8 %v362
        %v364 = vlaneseq
        %v365 = vshrl.u32 %v364, 7
        %v366 = vsub.s32 %v363, %v365
        %v367 = vrot.slane %v359, %v366
        %368 = vrot.lane.b32.xlu0 %v367, 124
        %v369 = vpop.permute.xlu0 %368
        %371 = vst.msk [vmem:[#allocation3 + $0x4] sm:$0x3] %vm342, %v369
        %v372 = vld [vmem:[%s1] sm:$0xf]
        %v373 = vld [vmem:[%s1 + $0x4] sm:$0xf]
        %v374 = vld [vmem:[#allocation3] sm:$0xf]
        %v375 = vld [vmem:[#allocation3 + $0x4] sm:$0x3]
        %v376 = vld [vmem:[%s2] sm:$0xff]
        %v377 = vld [vmem:[%s2 + $0x8] sm:$0xff]
        %379 = vset.pattern.permute.xlu0 0
        %380 = vperm.xlu0 %379, %v376
        %v381 = vpop.permute.xlu0 %380
        %384 = vset.pattern.permute.xlu0 0
        %385 = vperm.xlu0 %384, %v377
        %v386 = vpop.permute.xlu0 %385
        %v390 = vunpack.c.l.b16 %v372
        %v391 = vunpack.c.l.b16 %v373
        %v392 = vpack.c.b16 %v391, %v390
        %v395 = vunpack.c.l.b16 %v374
        %v396 = vunpack.c.l.b16 %v375
        %v397 = vpack.c.b16 %v396, %v395
        %vm398 = vcmask 97280
        %v400 = vsel %vm398, %v392, 0
        %vm402 = vcmask 1045504
        %v404 = vsel %vm402, %v397, 0
        %406 = vmatprep.subr.bf16.mxu0 0
        %407 = vmatpush1.bf16.msra.mxu0 %v404
        %408 = vmatprep.subr.bf16.mxu0 0
        %409 = vmatpush1.bf16.msra.mxu0 0
        %410 = vmatprep.subr.bf16.mxu0 0
        %411 = vmatpush1.bf16.msra.mxu0 0
        %412 = vmatprep.subr.bf16.mxu0 0
        %413 = vmatpush1.bf16.msra.mxu0 0
        %414 = vmatprep.subr.bf16.mxu0 0
        %415 = vmatpush1.bf16.msra.mxu0 0
        %416 = vmatprep.subr.bf16.mxu0 0
        %417 = vmatpush1.bf16.msra.mxu0 0
        %418 = vmatprep.subr.bf16.mxu0 0
        %419 = vmatpush1.bf16.msra.mxu0 0
        %420 = vmatprep.subr.bf16.mxu0 0
        %421 = vmatpush1.bf16.msra.mxu0 0
        %422 = vmatprep.subr.bf16.mxu0 0
        %423 = vmatpush1.bf16.msra.mxu0 0
        %424 = vmatprep.subr.bf16.mxu0 0
        %425 = vmatpush1.bf16.msra.mxu0 0
        %426 = vmatprep.subr.bf16.mxu0 0
        %427 = vmatpush1.bf16.msra.mxu0 0
        %428 = vmatprep.subr.bf16.mxu0 0
        %429 = vmatpush1.bf16.msra.mxu0 0
        %430 = vmatprep.subr.bf16.mxu0 0
        %431 = vmatpush1.bf16.msra.mxu0 0
        %432 = vmatprep.subr.bf16.mxu0 0
        %433 = vmatpush1.bf16.msra.mxu0 0
        %434 = vmatprep.subr.bf16.mxu0 0
        %435 = vmatpush1.bf16.msra.mxu0 0
        %436 = vmatprep.subr.bf16.mxu0 0
        %437 = vmatpush1.bf16.msra.mxu0 0
        %438 = vmatprep.mubr.bf16.mxu0 0
        %439 = vmatmul.mubr.bf16.gmra.mrb[0].mxu0 %v400
        %v440 = vpop.f32.mrb[0].mxu0
        %v441 = vadd.f32 %v381, %v440
        %v442 = vpop.f32.mrb[0].mxu0
        %v443 = vpop.f32.mrb[0].mxu0
        %v444 = vadd.f32 %v386, %v443
        %v445 = vpop.f32.mrb[0].mxu0
        %446 = vdwg.mxu0
        %v447 = vxor.u32 %v444, 2147483648
        %v448 = vmul.f32 %v447, 1.442695
        %v449 = vpow.pop %v448
        %v450 = vadd.f32 %v449, 1.0
        %v451 = vrcp.pop %v450
        %v452 = vmul.f32 1.0, %v451
        %v453 = vmul.f32 %v441, %v452
        %v454 = vpack.c.bf16 %v453, %v453
        %456 = vrot.lane.b32.xlu0 %v454, 4
        %v457 = vpop.permute.xlu0 %456
        %vm459 = vcmask 158752
        %460 = vst.msk [vmem:[#allocation4] sm:$0xf] %vm459, %v457
        %v461 = vpack.c.bf16 %v444, %v444
        %v463 = vrot.slane %v461, 4
        %464 = vrot.lane.b32.xlu0 %v463, 4
        %v465 = vpop.permute.xlu0 %464
        %vm467 = vcmask 162852
        %468 = vst.msk [vmem:[#allocation4] sm:$0xf0] %vm467, %v465
        %v469 = vld [vmem:[#allocation4] sm:$0xf]
        %vm470 = vcmask 125952
        %471 = vst.msk [vmem:[#allocation5] sm:$0xf] %vm470, %v469
        %v472 = vld [vmem:[#allocation4] sm:$0xf0]
        %vm473 = vcmask 130052
        %474 = vst.msk [vmem:[#allocation5 + $0x8] sm:$0xf0] %vm473, %v472
        %v475 = vld [vmem:[#allocation4] sm:$0xf]
        %v477 = vrot.slane %v475, 4
        %478 = vrot.lane.b32.xlu0 %v477, 126
        %v479 = vpop.permute.xlu0 %478
        %481 = vst.msk [vmem:[#allocation5] sm:$0xf0] %vm473, %v479
        %v482 = vld [vmem:[#allocation4] sm:$0xf0]
        %v484 = vrot.slane %v482, 4
        %485 = vrot.lane.b32.xlu0 %v484, 126
        %v486 = vpop.permute.xlu0 %485
        %488 = vst.msk [vmem:[#allocation5 + $0x10] sm:$0xf] %vm470, %v486
        %v489 = vld [vmem:[#allocation4] sm:$0xf]
        %491 = vrot.lane.b32.xlu0 %v489, 124
        %v492 = vpop.permute.xlu0 %491
        %494 = vst.msk [vmem:[#allocation5 + $0x8] sm:$0xf] %vm470, %v492
        %v495 = vld [vmem:[#allocation4] sm:$0xf0]
        %497 = vrot.lane.b32.xlu0 %v495, 124
        %v498 = vpop.permute.xlu0 %497
        %500 = vst.msk [vmem:[#allocation5 + $0x10] sm:$0xf0] %vm473, %v498
        %v501 = vld [vmem:[%s3] sm:$0xf]
        %v502 = vld [vmem:[%s3 + $0x4] sm:$0xf]
        %v503 = vld [vmem:[#allocation5] sm:$0xff]
        %v504 = vld [vmem:[#allocation5 + $0x8] sm:$0xff]
        %v505 = vld [vmem:[#allocation5 + $0x10] sm:$0xff]
        %v506 = vld [vmem:[%s4] sm:$0xff]
        %v507 = vld [vmem:[%s4 + $0x8] sm:$0xff]
        %509 = vset.pattern.permute.xlu0 0
        %510 = vperm.xlu0 %509, %v506
        %v511 = vpop.permute.xlu0 %510
        %514 = vset.pattern.permute.xlu0 0
        %515 = vperm.xlu0 %514, %v507
        %v516 = vpop.permute.xlu0 %515
        %v520 = vunpack.c.l.b16 %v501
        %v521 = vunpack.c.l.b16 %v502
        %v522 = vpack.c.b16 %v521, %v520
        %vm523 = vcmask 392192
        %v525 = vsel %vm523, %v522, 0
        %527 = vmatprep.subr.bf16.mxu0 0
        %528 = vmatpush1.bf16.msra.mxu0 %v503
        %529 = vmatprep.subr.bf16.mxu0 0
        %530 = vmatpush1.bf16.msra.mxu0 %v504
        %531 = vmatprep.subr.bf16.mxu0 0
        %532 = vmatpush1.bf16.msra.mxu0 %v505
        %533 = vmatprep.subr.bf16.mxu0 0
        %534 = vmatpush1.bf16.msra.mxu0 0
        %535 = vmatprep.subr.bf16.mxu0 0
        %536 = vmatpush1.bf16.msra.mxu0 0
        %537 = vmatprep.subr.bf16.mxu0 0
        %538 = vmatpush1.bf16.msra.mxu0 0
        %539 = vmatprep.subr.bf16.mxu0 0
        %540 = vmatpush1.bf16.msra.mxu0 0
        %541 = vmatprep.subr.bf16.mxu0 0
        %542 = vmatpush1.bf16.msra.mxu0 0
        %543 = vmatprep.subr.bf16.mxu0 0
        %544 = vmatpush1.bf16.msra.mxu0 0
        %545 = vmatprep.subr.bf16.mxu0 0
        %546 = vmatpush1.bf16.msra.mxu0 0
        %547 = vmatprep.subr.bf16.mxu0 0
        %548 = vmatpush1.bf16.msra.mxu0 0
        %549 = vmatprep.subr.bf16.mxu0 0
        %550 = vmatpush1.bf16.msra.mxu0 0
        %551 = vmatprep.subr.bf16.mxu0 0
        %552 = vmatpush1.bf16.msra.mxu0 0
        %553 = vmatprep.subr.bf16.mxu0 0
        %554 = vmatpush1.bf16.msra.mxu0 0
        %555 = vmatprep.subr.bf16.mxu0 0
        %556 = vmatpush1.bf16.msra.mxu0 0
        %557 = vmatprep.subr.bf16.mxu0 0
        %558 = vmatpush1.bf16.msra.mxu0 0
        %559 = vmatprep.mubr.bf16.mxu0 0
        %560 = vmatmul.mubr.bf16.gmra.mrb[0].mxu0 %v525
        %v561 = vpop.f32.mrb[0].mxu0
        %v562 = vadd.f32 %v511, %v561
        %v563 = vpop.f32.mrb[0].mxu0
        %v564 = vpop.f32.mrb[0].mxu0
        %v565 = vadd.f32 %v516, %v564
        %v566 = vpop.f32.mrb[0].mxu0
        %567 = vdwg.mxu0
        %v568 = vxor.u32 %v565, 2147483648
        %v569 = vmul.f32 %v568, 1.442695
        %v570 = vpow.pop %v569
        %v571 = vadd.f32 %v570, 1.0
        %v572 = vrcp.pop %v571
        %v573 = vmul.f32 1.0, %v572
        %v574 = vmul.f32 %v562, %v573
        %v575 = vld [vmem:[%s5] sm:$0xf]
        %v576 = vld [vmem:[%s6] sm:$0xff]
        %578 = vset.pattern.permute.xlu0 0
        %579 = vperm.xlu0 %578, %v576
        %v580 = vpop.permute.xlu0 %579
        %vm582 = vcmask 31744
        %v584 = vsel %vm582, %v575, 0
        %vm586 = vcmask 1041408
        %v588 = vsel %vm586, %v327, 0
        %590 = vmatprep.subr.bf16.mxu0 0
        %591 = vmatpush1.bf16.msra.mxu0 %v588
        %592 = vmatprep.subr.bf16.mxu0 0
        %593 = vmatpush1.bf16.msra.mxu0 0
        %594 = vmatprep.subr.bf16.mxu0 0
        %595 = vmatpush1.bf16.msra.mxu0 0
        %596 = vmatprep.subr.bf16.mxu0 0
        %597 = vmatpush1.bf16.msra.mxu0 0
        %598 = vmatprep.subr.bf16.mxu0 0
        %599 = vmatpush1.bf16.msra.mxu0 0
        %600 = vmatprep.subr.bf16.mxu0 0
        %601 = vmatpush1.bf16.msra.mxu0 0
        %602 = vmatprep.subr.bf16.mxu0 0
        %603 = vmatpush1.bf16.msra.mxu0 0
        %604 = vmatprep.subr.bf16.mxu0 0
        %605 = vmatpush1.bf16.msra.mxu0 0
        %606 = vmatprep.subr.bf16.mxu0 0
        %607 = vmatpush1.bf16.msra.mxu0 0
        %608 = vmatprep.subr.bf16.mxu0 0
        %609 = vmatpush1.bf16.msra.mxu0 0
        %610 = vmatprep.subr.bf16.mxu0 0
        %611 = vmatpush1.bf16.msra.mxu0 0
        %612 = vmatprep.subr.bf16.mxu0 0
        %613 = vmatpush1.bf16.msra.mxu0 0
        %614 = vmatprep.subr.bf16.mxu0 0
        %615 = vmatpush1.bf16.msra.mxu0 0
        %616 = vmatprep.subr.bf16.mxu0 0
        %617 = vmatpush1.bf16.msra.mxu0 0
        %618 = vmatprep.subr.bf16.mxu0 0
        %619 = vmatpush1.bf16.msra.mxu0 0
        %620 = vmatprep.subr.bf16.mxu0 0
        %621 = vmatpush1.bf16.msra.mxu0 0
        %622 = vmatprep.mubr.bf16.mxu0 0
        %623 = vmatmul.mubr.bf16.gmra.mrb[0].mxu0 %v584
        %v624 = vpop.f32.mrb[0].mxu0
        %v625 = vadd.f32 %v580, %v624
        %v626 = vpop.f32.mrb[0].mxu0
        %v627 = vpop.f32.mrb[0].mxu0
        %v628 = vpop.f32.mrb[0].mxu0
        %629 = vdwg.mxu0
        %v630 = vadd.f32 %v574, %v625
        %vm631 = vcmask 130048
        %632 = vst.msk [vmem:[%s291] sm:$0xff] %vm631, %v630
        %v633 = vadd.f32 %v565, %v625
        %634 = vst.msk [vmem:[%s291 + $0x8] sm:$0xff] %vm631, %v633
        %s635 = sand.u32 %s197, 1
        %s636 = scalar_lea.sflag [#allocation7], %s635
        %s637 = sand.u32 %s197, 1
        %s638 = smul.addr %s637, 16
        %s639 = scalar_lea.vmem [#allocation6], %s638
        // Predicated region
        $region57: #{tpu_custom_call.1} parent=47 // pred_check
          %p640 = pneg %p207
        $region58: #{tpu_custom_call.1} parent=47 // pred_check_branch
          %642 = sbr.rel (%p640) target = $region60
        $region59: #{tpu_custom_call.1} parent=47 // pred_region
          %s644 = ssub.s32 256, 256
          %645 = vsyncadd %s636, %s644
          %s646 = smul.addr %s25, 2
          %s647 = sadd.s32 %s26, %s646
          %s648 = smul.addr %s647, 128
          %s649 = scalar_lea.hbm %s7, %s648
          %s650 = sshll.u32 %s639, 4
          %s651 = int_to_ptr.vmem [resolvable:$true] %s650
          %656 = dma.vmem_to_hbm [thread:$0]  %s651, 256, %s649, %s636, 128, 128, 8
        $region60: #{tpu_custom_call.1} parent=47 // pred_fallthru
          _
      $region48: #{tpu_custom_call.1} parent=5 // pred_fallthru
        _
      %p657 = scmp.le.s32.totalorder 2, %s16
      // Predicated region
      $region61: #{tpu_custom_call.1} parent=5 // pred_check
        %p658 = pneg %p657
      $region62: #{tpu_custom_call.1} parent=5 // pred_check_branch
        %660 = sbr.rel (%p658) target = $region64
      $region63: #{tpu_custom_call.1} parent=5 // pred_region
        %s661 = ssub.s32 %s16, 2
        // Predicated region
        $region65: #{tpu_custom_call.1} parent=63 // pred_check
          %p662 = pneg %p213
        $region66: #{tpu_custom_call.1} parent=63 // pred_check_branch
          %664 = sbr.rel (%p662) target = $region68
        $region67: #{tpu_custom_call.1} parent=63 // pred_region
          %s665 = sand.u32 %s198, 1
          %s666 = scalar_lea.sflag [#allocation7], %s665
          %s667 = sand.u32 %s198, 1
          %s668 = smul.addr %s667, 16
          %s669 = scalar_lea.vmem [#allocation6], %s668
          %670 = dma.done %s666, 256
        $region68: #{tpu_custom_call.1} parent=63 // pred_fallthru
          _
      $region64: #{tpu_custom_call.1} parent=5 // pred_fallthru
        _
    $region6: #{tpu_custom_call.1} parent=1 // loop_footer
      %s20 = sadd.s32 1, %s16
    $region7: #{tpu_custom_call.1} parent=1 // loop_footer_branch
      %15 = sbr.rel target = $region3
    $region8: #{tpu_custom_call.1} parent=1 // loop_exit
      _
    %671 = vsyncpa [#allocation7], 1
    %s672 = scalar_lea.sflag [#allocation7], 1
    %673 = vsyncpa %s672, 1

// kernel: tpu_custom_call.1
$region0: #{tpu_custom_call.1}
  #allocation0 [shape = 'u32[]', space=smem, size = 0x4, offset = 0x4, fixed_abs, tag = 'smem constant byte address 0x4 - core index']
  #allocation1 [shape = 'u32[144,128]{1,0:T(1,128)}', space=vmem, size = 0x12000, scoped, tag = 'internal scratch']
  #allocation2 [shape = 'bf16[4,20]{1,0:T(4,128)(2,1)}', space=vmem, size = 0x400, scoped, tag = 'scratch operand']
  #allocation3 [shape = 'bf16[12,16]{1,0:T(8,128)(2,1)}', space=vmem, size = 0x1000, scoped, tag = 'scratch operand']
  #allocation4 [shape = 'bf16[16,20]{1,0:T(16,128)(2,1)}', space=vmem, size = 0x1000, scoped, tag = 'scratch operand']
  #allocation5 [shape = 'bf16[48,16]{1,0:T(16,128)(2,1)}', space=vmem, size = 0x3000, scoped, tag = 'scratch operand']
  %s0 = inlined_call_operand.vmem [shape: f32[2,4,16], index: 0, kind: input, shape index: {}]
  %s1 = inlined_call_operand.vmem [shape: bf16[16,12], index: 1, kind: input, shape index: {}]
  %s2 = inlined_call_operand.vmem [shape: f32[16,1], index: 2, kind: input, shape index: {}]
  %s3 = inlined_call_operand.vmem [shape: bf16[16,48], index: 3, kind: input, shape index: {}]
  %s4 = inlined_call_operand.vmem [shape: f32[16,1], index: 4, kind: input, shape index: {}]
  %s5 = inlined_call_operand.vmem [shape: bf16[8,4], index: 5, kind: input, shape index: {}]
  %s6 = inlined_call_operand.vmem [shape: f32[8,1], index: 6, kind: input, shape index: {}]
  %s7 = inlined_call_operand.hbm [shape: f32[2,16,16], index: 7, kind: output, shape index: {}]
  %s8 = sld [smem:[#allocation0]]
  $region69: #{tpu_custom_call.1} parent=0
    _
  %s10 = ssub.s32 1, %s8
  %s11 = scalar_select 0, %s10, %s8
  $region1: #{tpu_custom_call.1} parent=0
    #allocation6 [shape = 'u8[16384]{0}', space=vmem, size = 0x4000, scoped, tag = 'output window, operand 0']
    #allocation7 [shape = 's32[2]{0}', space=sflag, size = 0x8, scoped, tag = 'scoped memory for tpu_custom_call.1']
    %12 = vsyncpa [#allocation7], 0
    %s13 = scalar_lea.sflag [#allocation7], 1
    %14 = vsyncpa %s13, 0
    loop: start=0, step=1, limit=4
    $region2: #{tpu_custom_call.1} parent=1 // loop_pre_header
      _
    $region3: #{tpu_custom_call.1} parent=1 // loop_header
      %s16 = sphi 0, %s20
      %p17 = scmp.ge.s32.totalorder %s16, 4
      %s23 = sphi 0, %s35
      %s24 = sphi 0, %s31
      %s25 = sphi 0, %s23
      %s26 = sphi 0, %s24
      %s27 = sphi 0, %s25
      %s28 = sphi 0, %s26
      %s40 = sphi 0, %s42
      %s43 = sphi 0, %s40
      %s44 = sphi 0, %s43
      %s60 = sphi 0, %s44
      %s64 = sphi 0, %s64
      %s66 = sphi 0, %s64
      %s67 = sphi 0, %s66
      %s81 = sphi 0, %s67
      %s85 = sphi 0, %s85
      %s87 = sphi 0, %s85
      %s88 = sphi 0, %s87
      %s102 = sphi 0, %s88
      %s106 = sphi 0, %s106
      %s108 = sphi 0, %s106
      %s109 = sphi 0, %s108
      %s123 = sphi 0, %s109
      %s127 = sphi 0, %s127
      %s129 = sphi 0, %s127
      %s130 = sphi 0, %s129
      %s144 = sphi 0, %s130
      %s148 = sphi 0, %s148
      %s150 = sphi 0, %s148
      %s151 = sphi 0, %s150
      %s165 = sphi 0, %s151
      %s169 = sphi 0, %s169
      %s171 = sphi 0, %s169
      %s172 = sphi 0, %s171
      %s186 = sphi 0, %s172
      %s194 = sphi 0, %s196
      %s197 = sphi 0, %s194
      %s198 = sphi 0, %s197
      %s214 = sphi 0, %s198
    $region4: #{tpu_custom_call.1} parent=1 // loop_header_branch
      %19 = sbr.rel (%p17) target = $region8
    $region5: #{tpu_custom_call.1} parent=1 // loop_body
      %s21 = ssub.s32 %s16, 1
      %s22 = ssub.s32 %s16, 2
      %s29 = sadd.s32 1, %s24
      %p30 = scmp.ge.s32.totalorder %s29, 1
      %s31 = scalar_select %p30, 0, %s29
      %s32 = sadd.s32 1, %s23
      %s33 = scalar_select %p30, %s32, %s23
      %p34 = scmp.ge.s32.totalorder %s33, 2
      %s35 = scalar_select %p34, 0, %s33
      %s36 = ssub.s32 %s23, %s35
      %s37 = ssub.s32 %s24, %s31
      %s38 = sor.u32 %s36, %s37
      %p39 = scmp.eq.s32.totalorder %s38, 0
      %s41 = sadd.s32 %s40, 1
      %s42 = scalar_select %p39, %s40, %s41
      %p45 = pneg %p39
      %p46 = scmp.eq.s32.totalorder %s16, 1
      %p47 = por %p45, %p46
      %p48 = scmp.ne.s32.totalorder %s40, %s43
      %p49 = scmp.eq.s32.totalorder %s16, 0
      %p50 = por %p48, %p49
      %p51 = scmp.ne.s32.totalorder %s40, %s43
      %p52 = scmp.eq.s32.totalorder %s21, 1
      %p53 = por %p51, %p52
      %p54 = scmp.ne.s32.totalorder %s43, %s44
      %p55 = scmp.eq.s32.totalorder %s21, 0
      %p56 = por %p54, %p55
      %p57 = scmp.ne.s32.totalorder %s43, %s44
      %p58 = scmp.eq.s32.totalorder %s22, 1
      %p59 = por %p57, %p58
      %p61 = scmp.ne.s32.totalorder %s44, %s60
      %p62 = scmp.eq.s32.totalorder %s22, 0
      %p63 = por %p61, %p62
      %s65 = sadd.s32 %s64, 1
      %p68 = scmp.eq.s32.totalorder %s16, 1
      %p69 = scmp.ne.s32.totalorder %s64, %s66
      %p70 = scmp.eq.s32.totalorder %s16, 0
      %p71 = por %p69, %p70
      %p72 = scmp.ne.s32.totalorder %s64, %s66
      %p73 = scmp.eq.s32.totalorder %s21, 1
      %p74 = por %p72, %p73
      %p75 = scmp.ne.s32.totalorder %s66, %s67
      %p76 = scmp.eq.s32.totalorder %s21, 0
      %p77 = por %p75, %p76
      %p78 = scmp.ne.s32.totalorder %s66, %s67
      %p79 = scmp.eq.s32.totalorder %s22, 1
      %p80 = por %p78, %p79
      %p82 = scmp.ne.s32.totalorder %s67, %s81
      %p83 = scmp.eq.s32.totalorder %s22, 0
      %p84 = por %p82, %p83
      %s86 = sadd.s32 %s85, 1
      %p89 = scmp.eq.s32.totalorder %s16, 1
      %p90 = scmp.ne.s32.totalorder %s85, %s87
      %p91 = scmp.eq.s32.totalorder %s16, 0
      %p92 = por %p90, %p91
      %p93 = scmp.ne.s32.totalorder %s85, %s87
      %p94 = scmp.eq.s32.totalorder %s21, 1
      %p95 = por %p93, %p94
      %p96 = scmp.ne.s32.totalorder %s87, %s88
      %p97 = scmp.eq.s32.totalorder %s21, 0
      %p98 = por %p96, %p97
      %p99 = scmp.ne.s32.totalorder %s87, %s88
      %p100 = scmp.eq.s32.totalorder %s22, 1
      %p101 = por %p99, %p100
      %p103 = scmp.ne.s32.totalorder %s88, %s102
      %p104 = scmp.eq.s32.totalorder %s22, 0
      %p105 = por %p103, %p104
      %s107 = sadd.s32 %s106, 1
      %p110 = scmp.eq.s32.totalorder %s16, 1
      %p111 = scmp.ne.s32.totalorder %s106, %s108
      %p112 = scmp.eq.s32.totalorder %s16, 0
      %p113 = por %p111, %p112
      %p114 = scmp.ne.s32.totalorder %s106, %s108
      %p115 = scmp.eq.s32.totalorder %s21, 1
      %p116 = por %p114, %p115
      %p117 = scmp.ne.s32.totalorder %s108, %s109
      %p118 = scmp.eq.s32.totalorder %s21, 0
      %p119 = por %p117, %p118
      %p120 = scmp.ne.s32.totalorder %s108, %s109
      %p121 = scmp.eq.s32.totalorder %s22, 1
      %p122 = por %p120, %p121
      %p124 = scmp.ne.s32.totalorder %s109, %s123
      %p125 = scmp.eq.s32.totalorder %s22, 0
      %p126 = por %p124, %p125
      %s128 = sadd.s32 %s127, 1
      %p131 = scmp.eq.s32.totalorder %s16, 1
      %p132 = scmp.ne.s32.totalorder %s127, %s129
      %p133 = scmp.eq.s32.totalorder %s16, 0
      %p134 = por %p132, %p133
      %p135 = scmp.ne.s32.totalorder %s127, %s129
      %p136 = scmp.eq.s32.totalorder %s21, 1
      %p137 = por %p135, %p136
      %p138 = scmp.ne.s32.totalorder %s129, %s130
      %p139 = scmp.eq.s32.totalorder %s21, 0
      %p140 = por %p138, %p139
      %p141 = scmp.ne.s32.totalorder %s129, %s130
      %p142 = scmp.eq.s32.totalorder %s22, 1
      %p143 = por %p141, %p142
      %p145 = scmp.ne.s32.totalorder %s130, %s144
      %p146 = scmp.eq.s32.totalorder %s22, 0
      %p147 = por %p145, %p146
      %s149 = sadd.s32 %s148, 1
      %p152 = scmp.eq.s32.totalorder %s16, 1
      %p153 = scmp.ne.s32.totalorder %s148, %s150
      %p154 = scmp.eq.s32.totalorder %s16, 0
      %p155 = por %p153, %p154
      %p156 = scmp.ne.s32.totalorder %s148, %s150
      %p157 = scmp.eq.s32.totalorder %s21, 1
      %p158 = por %p156, %p157
      %p159 = scmp.ne.s32.totalorder %s150, %s151
      %p160 = scmp.eq.s32.totalorder %s21, 0
      %p161 = por %p159, %p160
      %p162 = scmp.ne.s32.totalorder %s150, %s151
      %p163 = scmp.eq.s32.totalorder %s22, 1
      %p164 = por %p162, %p163
      %p166 = scmp.ne.s32.totalorder %s151, %s165
      %p167 = scmp.eq.s32.totalorder %s22, 0
      %p168 = por %p166, %p167
      %s170 = sadd.s32 %s169, 1
      %p173 = scmp.eq.s32.totalorder %s16, 1
      %p174 = scmp.ne.s32.totalorder %s169, %s171
      %p175 = scmp.eq.s32.totalorder %s16, 0
      %p176 = por %p174, %p175
      %p177 = scmp.ne.s32.totalorder %s169, %s171
      %p178 = scmp.eq.s32.totalorder %s21, 1
      %p179 = por %p177, %p178
      %p180 = scmp.ne.s32.totalorder %s171, %s172
      %p181 = scmp.eq.s32.totalorder %s21, 0
      %p182 = por %p180, %p181
      %p183 = scmp.ne.s32.totalorder %s171, %s172
      %p184 = scmp.eq.s32.totalorder %s22, 1
      %p185 = por %p183, %p184
      %p187 = scmp.ne.s32.totalorder %s172, %s186
      %p188 = scmp.eq.s32.totalorder %s22, 0
      %p189 = por %p187, %p188
      %s190 = ssub.s32 %s23, %s35
      %s191 = ssub.s32 %s24, %s31
      %s192 = sor.u32 %s190, %s191
      %p193 = scmp.eq.s32.totalorder %s192, 0
      %s195 = sadd.s32 %s194, 1
      %s196 = scalar_select %p193, %s194, %s195
      %p199 = pneg %p193
      %p200 = scmp.eq.s32.totalorder %s16, 1
      %p201 = por %p199, %p200
      %p202 = scmp.ne.s32.totalorder %s194, %s197
      %p203 = scmp.eq.s32.totalorder %s16, 0
      %p204 = por %p202, %p203
      %p205 = scmp.ne.s32.totalorder %s194, %s197
      %p206 = scmp.eq.s32.totalorder %s21, 1
      %p207 = por %p205, %p206
      %p208 = scmp.ne.s32.totalorder %s197, %s198
      %p209 = scmp.eq.s32.totalorder %s21, 0
      %p210 = por %p208, %p209
      %p211 = scmp.ne.s32.totalorder %s197, %s198
      %p212 = scmp.eq.s32.totalorder %s22, 1
      %p213 = por %p211, %p212
      %p215 = scmp.ne.s32.totalorder %s198, %s214
      %p216 = scmp.eq.s32.totalorder %s22, 0
      %p217 = por %p215, %p216
      %p218 = scmp.le.s32.totalorder 1, %s16
      %p219 = scmp.lt.s32.totalorder %s16, 3
      %p220 = pnand %p218, %p219
      %p221 = pneg %p220
      // Predicated region
      $region9: #{tpu_custom_call.1} parent=5 // pred_check
        _
      $region10: #{tpu_custom_call.1} parent=5 // pred_check_branch
        %223 = sbr.rel (%p220) target = $region12
      $region11: #{tpu_custom_call.1} parent=5 // pred_region
        %s224 = ssub.s32 %s16, 1
        // Predicated region
        $region13: #{tpu_custom_call.1} parent=11 // pred_check
          %p225 = pneg %p77
        $region14: #{tpu_custom_call.1} parent=11 // pred_check_branch
          %227 = sbr.rel (%p225) target = $region16
        $region15: #{tpu_custom_call.1} parent=11 // pred_region
          _
        $region16: #{tpu_custom_call.1} parent=11 // pred_fallthru
          _
        // Predicated region
        $region17: #{tpu_custom_call.1} parent=11 // pred_check
          %p228 = pneg %p98
        $region18: #{tpu_custom_call.1} parent=11 // pred_check_branch
          %230 = sbr.rel (%p228) target = $region20
        $region19: #{tpu_custom_call.1} parent=11 // pred_region
          _
        $region20: #{tpu_custom_call.1} parent=11 // pred_fallthru
          _
        // Predicated region
        $region21: #{tpu_custom_call.1} parent=11 // pred_check
          %p231 = pneg %p119
        $region22: #{tpu_custom_call.1} parent=11 // pred_check_branch
          %233 = sbr.rel (%p231) target = $region24
        $region23: #{tpu_custom_call.1} parent=11 // pred_region
          _
        $region24: #{tpu_custom_call.1} parent=11 // pred_fallthru
          _
        // Predicated region
        $region25: #{tpu_custom_call.1} parent=11 // pred_check
          %p234 = pneg %p140
        $region26: #{tpu_custom_call.1} parent=11 // pred_check_branch
          %236 = sbr.rel (%p234) target = $region28
        $region27: #{tpu_custom_call.1} parent=11 // pred_region
          _
        $region28: #{tpu_custom_call.1} parent=11 // pred_fallthru
          _
        // Predicated region
        $region29: #{tpu_custom_call.1} parent=11 // pred_check
          %p237 = pneg %p161
        $region30: #{tpu_custom_call.1} parent=11 // pred_check_branch
          %239 = sbr.rel (%p237) target = $region32
        $region31: #{tpu_custom_call.1} parent=11 // pred_region
          _
        $region32: #{tpu_custom_call.1} parent=11 // pred_fallthru
          _
        // Predicated region
        $region33: #{tpu_custom_call.1} parent=11 // pred_check
          %p240 = pneg %p182
        $region34: #{tpu_custom_call.1} parent=11 // pred_check_branch
          %242 = sbr.rel (%p240) target = $region36
        $region35: #{tpu_custom_call.1} parent=11 // pred_region
          _
        $region36: #{tpu_custom_call.1} parent=11 // pred_fallthru
          _
      $region12: #{tpu_custom_call.1} parent=5 // pred_fallthru
        _
      %p243 = scmp.lt.s32.totalorder %s16, 2
      // Predicated region
      $region37: #{tpu_custom_call.1} parent=5 // pred_check
        %p244 = pneg %p243
      $region38: #{tpu_custom_call.1} parent=5 // pred_check_branch
        %246 = sbr.rel (%p244) target = $region40
      $region39: #{tpu_custom_call.1} parent=5 // pred_region
        // Predicated region
        $region41: #{tpu_custom_call.1} parent=39 // pred_check
          %p247 = pneg %p50
        $region42: #{tpu_custom_call.1} parent=39 // pred_check_branch
          %249 = sbr.rel (%p247) target = $region44
        $region43: #{tpu_custom_call.1} parent=39 // pred_region
          %p250 = scmp.lt.s32.totalorder %s23, 1
          %s251 = scalar_select %p250, %s23, 1
          %p252 = scmp.lt.s32.totalorder %s24, 0
          %s253 = scalar_select %p252, %s24, 0
          %s254 = sadd.s32 %s253, %s251
          %s255 = smul.addr %s254, 4
          %s256 = scalar_lea.vmem %s0, %s255
        $region44: #{tpu_custom_call.1} parent=39 // pred_fallthru
          _
      $region40: #{tpu_custom_call.1} parent=5 // pred_fallthru
        _
      %p257 = scmp.le.s32.totalorder 1, %s16
      %p258 = scmp.lt.s32.totalorder %s16, 3
      %p259 = pnand %p257, %p258
      %p260 = pneg %p259
      // Predicated region
      $region45: #{tpu_custom_call.1} parent=5 // pred_check
        _
      $region46: #{tpu_custom_call.1} parent=5 // pred_check_branch
        %262 = sbr.rel (%p259) target = $region48
      $region47: #{tpu_custom_call.1} parent=5 // pred_region
        %s263 = ssub.s32 %s16, 1
        %p264 = scmp.lt.s32.totalorder %s25, 1
        %s265 = scalar_select %p264, %s25, 1
        %p266 = scmp.lt.s32.totalorder %s26, 0
        %s267 = scalar_select %p266, %s26, 0
        %s268 = sadd.s32 %s267, %s265
        %s269 = smul.addr %s268, 4
        %s270 = scalar_lea.vmem %s0, %s269
        %p271 = pneg %p56
        %p272 = pneg %p53
        %p273 = pneg %p77
        %p274 = pneg %p74
        %p275 = pneg %p98
        %p276 = pneg %p95
        %p277 = pneg %p119
        %p278 = pneg %p116
        %p279 = pneg %p140
        %p280 = pneg %p137
        %p281 = pneg %p161
        %p282 = pneg %p158
        %p283 = pneg %p182
        %p284 = pneg %p179
        %p285 = pneg %p210
        %p286 = pneg %p207
        %s287 = sand.u32 %s197, 1
        %s288 = scalar_lea.sflag [#allocation7], %s287
        %s289 = sand.u32 %s197, 1
        %s290 = smul.addr %s289, 16
        %s291 = scalar_lea.vmem [#allocation6], %s290
        %p292 = scmp.lt.s32.totalorder %s25, 1
        %s293 = scalar_select %p292, %s25, 1
        %p294 = scmp.lt.s32.totalorder %s26, 0
        %s295 = scalar_select %p294, %s26, 0
        %s296 = sadd.s32 %s295, %s293
        %s297 = smul.addr %s296, 4
        %s298 = scalar_lea.vmem %s0, %s297
        %p300 = scmp.eq.s32.totalorder %s26, 0
        // Predicated region
        $region49: #{tpu_custom_call.1} parent=47 // pred_check
          %p301 = pneg %p300
        $region50: #{tpu_custom_call.1} parent=47 // pred_check_branch
          %303 = sbr.rel (%p301) target = $region52
        $region51: #{tpu_custom_call.1} parent=47 // pred_region
          %vm304 = vcmask 25600
          %305 = vst.msk [vmem:[#allocation2] sm:$0x3] %vm304, 0
          %vm306 = vcmask 31744
          %307 = vst.msk [vmem:[#allocation4] sm:$0xff] %vm306, 0
        $region52: #{tpu_custom_call.1} parent=47 // pred_fallthru
          _
        %p308 = scmp.gt.s32.totalorder %s26, 0
        // Predicated region
        $region53: #{tpu_custom_call.1} parent=47 // pred_check
          %p309 = pneg %p308
        $region54: #{tpu_custom_call.1} parent=47 // pred_check_branch
          %311 = sbr.rel (%p309) target = $region56
        $region55: #{tpu_custom_call.1} parent=47 // pred_region
          %v312 = vld [vmem:[#allocation2] sm:$0x3]
          %314 = vrot.lane.b32.xlu0 %v312, 112
          %v315 = vpop.permute.xlu0 %314
          %vm317 = vcmask 25600
          %318 = vst.msk [vmem:[#allocation2] sm:$0x3] %vm317, %v315
          %v319 = vld [vmem:[#allocation4] sm:$0xff]
          %321 = vrot.lane.b32.xlu0 %v319, 112
          %v322 = vpop.permute.xlu0 %321
          %vm324 = vcmask 31744
          %325 = vst.msk [vmem:[#allocation4] sm:$0xff] %vm324, %v322
        $region56: #{tpu_custom_call.1} parent=47 // pred_fallthru
          _
        %v326 = vld [vmem:[%s298] sm:$0xf]
        %v327 = vpack.c.bf16 %v326, %v326
        %v330 = vunpack.c.l.s4 1983009808
        %v331 = vunpack.c.0.s8 %v330
        %v332 = vlaneseq
        %v333 = vshrl.u32 %v332, 7
        %v334 = vsub.s32 %v331, %v333
        %v335 = vrot.slane %v327, %v334
        %336 = vrot.lane.b32.xlu0 %v335, 4
        %v337 = vpop.permute.xlu0 %336
        %vm339 = vcmask 156704
        %340 = vst.msk [vmem:[#allocation2] sm:$0x3] %vm339, %v337
        %v341 = vld [vmem:[#allocation2] sm:$0x3]
        %vm342 = vcmask 123904
        %343 = vst.msk [vmem:[#allocation3] sm:$0x3] %vm342, %v341
        %v344 = vld [vmem:[#allocation2] sm:$0x3]
        %v346 = vcombine.low %v344, %v344
        %v348 = vunpack.c.l.s4 1983009808
        %v349 = vunpack.c.0.s8 %v348
        %v350 = vlaneseq
        %v351 = vshrl.u32 %v350, 7
        %v352 = vsub.s32 %v349, %v351
        %v353 = vrot.slane %v346, %v352
        %354 = vrot.lane.b32.xlu0 %v353, 126
        %v355 = vpop.permute.xlu0 %354
        %vm357 = vcmask 125954
        %358 = vst.msk [vmem:[#allocation3] sm:$0xc] %vm357, %v355
        %v359 = vld [vmem:[#allocation2] sm:$0x3]
        %v362 = vunpack.c.l.s4 1983009808
        %v363 = vunpack.c.0.s8 %v362
        %v364 = vlaneseq
        %v365 = vshrl.u32 %v364, 7
        %v366 = vsub.s32 %v363, %v365
        %v367 = vrot.slane %v359, %v366
        %368 = vrot.lane.b32.xlu0 %v367, 124
        %v369 = vpop.permute.xlu0 %368
        %371 = vst.msk [vmem:[#allocation3 + $0x4] sm:$0x3] %vm342, %v369
        %v372 = vld [vmem:[%s1] sm:$0xf]
        %v373 = vld [vmem:[%s1 + $0x4] sm:$0xf]
        %v374 = vld [vmem:[#allocation3] sm:$0xf]
        %v375 = vld [vmem:[#allocation3 + $0x4] sm:$0x3]
        %v376 = vld [vmem:[%s2] sm:$0xff]
        %v377 = vld [vmem:[%s2 + $0x8] sm:$0xff]
        %379 = vset.pattern.permute.xlu0 0
        %380 = vperm.xlu0 %379, %v376
        %v381 = vpop.permute.xlu0 %380
        %384 = vset.pattern.permute.xlu0 0
        %385 = vperm.xlu0 %384, %v377
        %v386 = vpop.permute.xlu0 %385
        %v390 = vunpack.c.l.b16 %v372
        %v391 = vunpack.c.l.b16 %v373
        %v392 = vpack.c.b16 %v391, %v390
        %v395 = vunpack.c.l.b16 %v374
        %v396 = vunpack.c.l.b16 %v375
        %v397 = vpack.c.b16 %v396, %v395
        %vm398 = vcmask 97280
        %v400 = vsel %vm398, %v392, 0
        %vm402 = vcmask 1045504
        %v404 = vsel %vm402, %v397, 0
        %406 = vmatprep.subr.bf16.mxu0 0
        %407 = vmatpush1.bf16.msra.mxu0 %v404
        %408 = vmatprep.subr.bf16.mxu0 0
        %409 = vmatpush1.bf16.msra.mxu0 0
        %410 = vmatprep.subr.bf16.mxu0 0
        %411 = vmatpush1.bf16.msra.mxu0 0
        %412 = vmatprep.subr.bf16.mxu0 0
        %413 = vmatpush1.bf16.msra.mxu0 0
        %414 = vmatprep.subr.bf16.mxu0 0
        %415 = vmatpush1.bf16.msra.mxu0 0
        %416 = vmatprep.subr.bf16.mxu0 0
        %417 = vmatpush1.bf16.msra.mxu0 0
        %418 = vmatprep.subr.bf16.mxu0 0
        %419 = vmatpush1.bf16.msra.mxu0 0
        %420 = vmatprep.subr.bf16.mxu0 0
        %421 = vmatpush1.bf16.msra.mxu0 0
        %422 = vmatprep.subr.bf16.mxu0 0
        %423 = vmatpush1.bf16.msra.mxu0 0
        %424 = vmatprep.subr.bf16.mxu0 0
        %425 = vmatpush1.bf16.msra.mxu0 0
        %426 = vmatprep.subr.bf16.mxu0 0
        %427 = vmatpush1.bf16.msra.mxu0 0
        %428 = vmatprep.subr.bf16.mxu0 0
        %429 = vmatpush1.bf16.msra.mxu0 0
        %430 = vmatprep.subr.bf16.mxu0 0
        %431 = vmatpush1.bf16.msra.mxu0 0
        %432 = vmatprep.subr.bf16.mxu0 0
        %433 = vmatpush1.bf16.msra.mxu0 0
        %434 = vmatprep.subr.bf16.mxu0 0
        %435 = vmatpush1.bf16.msra.mxu0 0
        %436 = vmatprep.subr.bf16.mxu0 0
        %437 = vmatpush1.bf16.msra.mxu0 0
        %438 = vmatprep.mubr.bf16.mxu0 0
        %439 = vmatmul.mubr.bf16.gmra.mrb[0].mxu0 %v400
        %v440 = vpop.f32.mrb[0].mxu0
        %v441 = vadd.f32 %v381, %v440
        %v442 = vpop.f32.mrb[0].mxu0
        %v443 = vpop.f32.mrb[0].mxu0
        %v444 = vadd.f32 %v386, %v443
        %v445 = vpop.f32.mrb[0].mxu0
        %446 = vdwg.mxu0
        %v447 = vxor.u32 %v444, 2147483648
        %v448 = vmul.f32 %v447, 1.442695
        %v449 = vpow.pop %v448
        %v450 = vadd.f32 %v449, 1.0
        %v451 = vrcp.pop %v450
        %v452 = vmul.f32 1.0, %v451
        %v453 = vmul.f32 %v441, %v452
        %v454 = vpack.c.bf16 %v453, %v453
        %456 = vrot.lane.b32.xlu0 %v454, 4
        %v457 = vpop.permute.xlu0 %456
        %vm459 = vcmask 158752
        %460 = vst.msk [vmem:[#allocation4] sm:$0xf] %vm459, %v457
        %v461 = vpack.c.bf16 %v444, %v444
        %v463 = vrot.slane %v461, 4
        %464 = vrot.lane.b32.xlu0 %v463, 4
        %v465 = vpop.permute.xlu0 %464
        %vm467 = vcmask 162852
        %468 = vst.msk [vmem:[#allocation4] sm:$0xf0] %vm467, %v465
        %v469 = vld [vmem:[#allocation4] sm:$0xf]
        %vm470 = vcmask 125952
        %471 = vst.msk [vmem:[#allocation5] sm:$0xf] %vm470, %v469
        %v472 = vld [vmem:[#allocation4] sm:$0xf0]
        %vm473 = vcmask 130052
        %474 = vst.msk [vmem:[#allocation5 + $0x8] sm:$0xf0] %vm473, %v472
        %v475 = vld [vmem:[#allocation4] sm:$0xf]
        %v477 = vrot.slane %v475, 4
        %478 = vrot.lane.b32.xlu0 %v477, 126
        %v479 = vpop.permute.xlu0 %478
        %481 = vst.msk [vmem:[#allocation5] sm:$0xf0] %vm473, %v479
        %v482 = vld [vmem:[#allocation4] sm:$0xf0]
        %v484 = vrot.slane %v482, 4
        %485 = vrot.lane.b32.xlu0 %v484, 126
        %v486 = vpop.permute.xlu0 %485
        %488 = vst.msk [vmem:[#allocation5 + $0x10] sm:$0xf] %vm470, %v486
        %v489 = vld [vmem:[#allocation4] sm:$0xf]
        %491 = vrot.lane.b32.xlu0 %v489, 124
        %v492 = vpop.permute.xlu0 %491
        %494 = vst.msk [vmem:[#allocation5 + $0x8] sm:$0xf] %vm470, %v492
        %v495 = vld [vmem:[#allocation4] sm:$0xf0]
        %497 = vrot.lane.b32.xlu0 %v495, 124
        %v498 = vpop.permute.xlu0 %497
        %500 = vst.msk [vmem:[#allocation5 + $0x10] sm:$0xf0] %vm473, %v498
        %v501 = vld [vmem:[%s3] sm:$0xf]
        %v502 = vld [vmem:[%s3 + $0x4] sm:$0xf]
        %v503 = vld [vmem:[#allocation5] sm:$0xff]
        %v504 = vld [vmem:[#allocation5 + $0x8] sm:$0xff]
        %v505 = vld [vmem:[#allocation5 + $0x10] sm:$0xff]
        %v506 = vld [vmem:[%s4] sm:$0xff]
        %v507 = vld [vmem:[%s4 + $0x8] sm:$0xff]
        %509 = vset.pattern.permute.xlu0 0
        %510 = vperm.xlu0 %509, %v506
        %v511 = vpop.permute.xlu0 %510
        %514 = vset.pattern.permute.xlu0 0
        %515 = vperm.xlu0 %514, %v507
        %v516 = vpop.permute.xlu0 %515
        %v520 = vunpack.c.l.b16 %v501
        %v521 = vunpack.c.l.b16 %v502
        %v522 = vpack.c.b16 %v521, %v520
        %vm523 = vcmask 392192
        %v525 = vsel %vm523, %v522, 0
        %527 = vmatprep.subr.bf16.mxu0 0
        %528 = vmatpush1.bf16.msra.mxu0 %v503
        %529 = vmatprep.subr.bf16.mxu0 0
        %530 = vmatpush1.bf16.msra.mxu0 %v504
        %531 = vmatprep.subr.bf16.mxu0 0
        %532 = vmatpush1.bf16.msra.mxu0 %v505
        %533 = vmatprep.subr.bf16.mxu0 0
        %534 = vmatpush1.bf16.msra.mxu0 0
        %535 = vmatprep.subr.bf16.mxu0 0
        %536 = vmatpush1.bf16.msra.mxu0 0
        %537 = vmatprep.subr.bf16.mxu0 0
        %538 = vmatpush1.bf16.msra.mxu0 0
        %539 = vmatprep.subr.bf16.mxu0 0
        %540 = vmatpush1.bf16.msra.mxu0 0
        %541 = vmatprep.subr.bf16.mxu0 0
        %542 = vmatpush1.bf16.msra.mxu0 0
        %543 = vmatprep.subr.bf16.mxu0 0
        %544 = vmatpush1.bf16.msra.mxu0 0
        %545 = vmatprep.subr.bf16.mxu0 0
        %546 = vmatpush1.bf16.msra.mxu0 0
        %547 = vmatprep.subr.bf16.mxu0 0
        %548 = vmatpush1.bf16.msra.mxu0 0
        %549 = vmatprep.subr.bf16.mxu0 0
        %550 = vmatpush1.bf16.msra.mxu0 0
        %551 = vmatprep.subr.bf16.mxu0 0
        %552 = vmatpush1.bf16.msra.mxu0 0
        %553 = vmatprep.subr.bf16.mxu0 0
        %554 = vmatpush1.bf16.msra.mxu0 0
        %555 = vmatprep.subr.bf16.mxu0 0
        %556 = vmatpush1.bf16.msra.mxu0 0
        %557 = vmatprep.subr.bf16.mxu0 0
        %558 = vmatpush1.bf16.msra.mxu0 0
        %559 = vmatprep.mubr.bf16.mxu0 0
        %560 = vmatmul.mubr.bf16.gmra.mrb[0].mxu0 %v525
        %v561 = vpop.f32.mrb[0].mxu0
        %v562 = vadd.f32 %v511, %v561
        %v563 = vpop.f32.mrb[0].mxu0
        %v564 = vpop.f32.mrb[0].mxu0
        %v565 = vadd.f32 %v516, %v564
        %v566 = vpop.f32.mrb[0].mxu0
        %567 = vdwg.mxu0
        %v568 = vxor.u32 %v565, 2147483648
        %v569 = vmul.f32 %v568, 1.442695
        %v570 = vpow.pop %v569
        %v571 = vadd.f32 %v570, 1.0
        %v572 = vrcp.pop %v571
        %v573 = vmul.f32 1.0, %v572
        %v574 = vmul.f32 %v562, %v573
        %v575 = vld [vmem:[%s5] sm:$0xf]
        %v576 = vld [vmem:[%s6] sm:$0xff]
        %578 = vset.pattern.permute.xlu0 0
        %579 = vperm.xlu0 %578, %v576
        %v580 = vpop.permute.xlu0 %579
        %vm582 = vcmask 31744
        %v584 = vsel %vm582, %v575, 0
        %vm586 = vcmask 1041408
        %v588 = vsel %vm586, %v327, 0
        %590 = vmatprep.subr.bf16.mxu0 0
        %591 = vmatpush1.bf16.msra.mxu0 %v588
        %592 = vmatprep.subr.bf16.mxu0 0
        %593 = vmatpush1.bf16.msra.mxu0 0
        %594 = vmatprep.subr.bf16.mxu0 0
        %595 = vmatpush1.bf16.msra.mxu0 0
        %596 = vmatprep.subr.bf16.mxu0 0
        %597 = vmatpush1.bf16.msra.mxu0 0
        %598 = vmatprep.subr.bf16.mxu0 0
        %599 = vmatpush1.bf16.msra.mxu0 0
        %600 = vmatprep.subr.bf16.mxu0 0
        %601 = vmatpush1.bf16.msra.mxu0 0
        %602 = vmatprep.subr.bf16.mxu0 0
        %603 = vmatpush1.bf16.msra.mxu0 0
        %604 = vmatprep.subr.bf16.mxu0 0
        %605 = vmatpush1.bf16.msra.mxu0 0
        %606 = vmatprep.subr.bf16.mxu0 0
        %607 = vmatpush1.bf16.msra.mxu0 0
        %608 = vmatprep.subr.bf16.mxu0 0
        %609 = vmatpush1.bf16.msra.mxu0 0
        %610 = vmatprep.subr.bf16.mxu0 0
        %611 = vmatpush1.bf16.msra.mxu0 0
        %612 = vmatprep.subr.bf16.mxu0 0
        %613 = vmatpush1.bf16.msra.mxu0 0
        %614 = vmatprep.subr.bf16.mxu0 0
        %615 = vmatpush1.bf16.msra.mxu0 0
        %616 = vmatprep.subr.bf16.mxu0 0
        %617 = vmatpush1.bf16.msra.mxu0 0
        %618 = vmatprep.subr.bf16.mxu0 0
        %619 = vmatpush1.bf16.msra.mxu0 0
        %620 = vmatprep.subr.bf16.mxu0 0
        %621 = vmatpush1.bf16.msra.mxu0 0
        %622 = vmatprep.mubr.bf16.mxu0 0
        %623 = vmatmul.mubr.bf16.gmra.mrb[0].mxu0 %v584
        %v624 = vpop.f32.mrb[0].mxu0
        %v625 = vadd.f32 %v580, %v624
        %v626 = vpop.f32.mrb[0].mxu0
        %v627 = vpop.f32.mrb[0].mxu0
        %v628 = vpop.f32.mrb[0].mxu0
        %629 = vdwg.mxu0
        %v630 = vadd.f32 %v574, %v625
        %vm631 = vcmask 130048
        %632 = vst.msk [vmem:[%s291] sm:$0xff] %vm631, %v630
        %v633 = vadd.f32 %v565, %v625
        %634 = vst.msk [vmem:[%s291 + $0x8] sm:$0xff] %vm631, %v633
        %s635 = sand.u32 %s197, 1
        %s636 = scalar_lea.sflag [#allocation7], %s635
        %s637 = sand.u32 %s197, 1
        %s638 = smul.addr %s637, 16
        %s639 = scalar_lea.vmem [#allocation6], %s638
        // Predicated region
        $region57: #{tpu_custom_call.1} parent=47 // pred_check
          %p640 = pneg %p207
        $region58: #{tpu_custom_call.1} parent=47 // pred_check_branch
          %642 = sbr.rel (%p640) target = $region60
        $region59: #{tpu_custom_call.1} parent=47 // pred_region
          %s644 = ssub.s32 256, 256
          %645 = vsyncadd %s636, %s644
          %s646 = smul.addr %s25, 2
          %s647 = sadd.s32 %s26, %s646
          %s648 = smul.addr %s647, 128
          %s649 = scalar_lea.hbm %s7, %s648
          %s650 = sshll.u32 %s639, 4
          %s651 = int_to_ptr.vmem [resolvable:$true] %s650
          %656 = dma.vmem_to_hbm [thread:$0]  %s651, 256, %s649, %s636, 128, 128, 8
        $region60: #{tpu_custom_call.1} parent=47 // pred_fallthru
          _
      $region48: #{tpu_custom_call.1} parent=5 // pred_fallthru
        _
      %p657 = scmp.le.s32.totalorder 2, %s16
      // Predicated region
      $region61: #{tpu_custom_call.1} parent=5 // pred_check
        %p658 = pneg %p657
      $region62: #{tpu_custom_call.1} parent=5 // pred_check_branch
        %660 = sbr.rel (%p658) target = $region64
      $region63: #{tpu_custom_call.1} parent=5 // pred_region
        %s661 = ssub.s32 %s16, 2
        // Predicated region
        $region65: #{tpu_custom_call.1} parent=63 // pred_check
          %p662 = pneg %p213
        $region66: #{tpu_custom_call.1} parent=63 // pred_check_branch
          %664 = sbr.rel (%p662) target = $region68
        $region67: #{tpu_custom_call.1} parent=63 // pred_region
          %s665 = sand.u32 %s198, 1
          %s666 = scalar_lea.sflag [#allocation7], %s665
          %s667 = sand.u32 %s198, 1
          %s668 = smul.addr %s667, 16
          %s669 = scalar_lea.vmem [#allocation6], %s668
          %670 = dma.done %s666, 256
        $region68: #{tpu_custom_call.1} parent=63 // pred_fallthru
          _
      $region64: #{tpu_custom_call.1} parent=5 // pred_fallthru
        _
    $region6: #{tpu_custom_call.1} parent=1 // loop_footer
      %s20 = sadd.s32 1, %s16
    $region7: #{tpu_custom_call.1} parent=1 // loop_footer_branch
      %15 = sbr.rel target = $region3
    $region8: #{tpu_custom_call.1} parent=1 // loop_exit
      _
    %671 = vsyncpa [#allocation7], 1
    %s672 = scalar_lea.sflag [#allocation7], 1
    %673 = vsyncpa %s672, 1

</llo_original>
